<compile_context>
chip_gen: v7x
topology: tpu7x:2x2x1
jax: 0.10.0
libtpu: 0.0.40
codegen_flags: <defaults>
</compile_context>

<pallas_src>
import functools

import jax
import jax.numpy as jnp
from jax import lax
from jax.experimental import pallas as pl
from jax.experimental.pallas import tpu as pltpu


# ----------------------------------------------------------------------------
# Fused kernel: all conv+BN(+ReLU) layers, 1x1 respass, residual add, final ReLU
# ----------------------------------------------------------------------------
def _resblock_kernel(x_ref, masks_ref, *rest, W, n_layers, norm, eps):
    """Whole _ResBlock forward in one step.

    x      : (Cin0, NS)      block input, NS = N*H*W on the lane axis
    masks  : (9, NS)         precomputed boundary masks, one per 3x3 tap
    per layer i: w (Cout, 9*Cin) folded taps, b/gamma/beta (Cout, 1)
    rw, rb : (Cout, Cin0), (Cout, 1)   1x1 respass weight/bias
    o      : (Cout, NS)      relu(conv-stack(x) + respass(x))
    """
    o_ref = rest[-1]
    rb_ref = rest[-2]
    rw_ref = rest[-3]
    layer_refs = rest[:-3]                       # 4 refs per layer

    NS = x_ref.shape[1]
    masks = masks_ref[...]                       # (9, NS) f32

    x0 = x_ref[...].astype(jnp.float32)          # (Cin0, NS)
    h = x0

    # Row-major (dy, dx) tap order — must match the host-side weight fold.
    offsets = [dy * W + dx for dy in (-1, 0, 1) for dx in (-1, 0, 1)]

    for i in range(n_layers):
        w_ref, b_ref, g_ref, bt_ref = layer_refs[4 * i: 4 * i + 4]

        # im2col: 9 lane-rotations (XLU) + masks (VPU), stacked on sublanes.
        # Masks zero every out-of-image tap, so roll wrap-around across image
        # and batch boundaries contributes nothing.
        slabs = []
        for tap, off in enumerate(offsets):
            shifted = pltpu.roll(h, (-off) % NS, axis=1) if off else h
            slabs.append(shifted * masks[tap:tap + 1, :])
        col = jnp.concatenate(slabs, axis=0)                     # (9*Cin, NS)

        # One MXU matmul per layer: (Cout, 9*Cin) x (9*Cin, NS).
        acc = jnp.dot(w_ref[...], col,
                      preferred_element_type=jnp.float32) + b_ref[...]

        if norm:
            # Training-mode BatchNorm over (N, H, W) == the whole lane axis.
            mean = jnp.mean(acc, axis=1, keepdims=True)          # (Cout, 1)
            var = jnp.mean(acc * acc, axis=1, keepdims=True) - mean * mean
            var = jnp.maximum(var, 0.0)                          # guard cancellation
            inv = g_ref[...] * lax.rsqrt(var + eps)
            acc = acc * inv + (bt_ref[...] - mean * inv)

        if i + 1 < n_layers:                                     # inter-layer ReLU
            acc = jnp.maximum(acc, 0.0)
        h = acc

    # Residual 1x1 respass + add + final ReLU, fused.
    r = jnp.dot(rw_ref[...], x0, preferred_element_type=jnp.float32) + rb_ref[...]
    o_ref[...] = jnp.maximum(h + r, 0.0).astype(o_ref.dtype)


# ----------------------------------------------------------------------------
# _ResBlock forward (Pallas) and pure-JAX reference
# ----------------------------------------------------------------------------
def resblock_forward(x_nchw, params, *, norm=True, eps=1e-5):
    N, Cin0, H, W = x_nchw.shape
    S = H * W
    NS = N * S

    # NCHW -> (C, N*H*W): channels on sublanes, batch*spatial dense on lanes.
    x = jnp.transpose(x_nchw, (1, 0, 2, 3)).reshape(Cin0, NS).astype(jnp.float32)

    # Precomputed per-tap boundary masks (9, NS).
    pos = jnp.arange(NS, dtype=jnp.int32) % S
    row = pos // W
    col = pos % W
    mask_list = []
    for dy in (-1, 0, 1):
        for dx in (-1, 0, 1):
            m = ((row + dy >= 0) & (row + dy < H) &
                 (col + dx >= 0) & (col + dx < W))
            mask_list.append(m)
    masks = jnp.stack(mask_list, axis=0).astype(jnp.float32)     # (9, NS)

    n_layers = len(params["conv_w"])
    Cout = params["conv_w"][0].shape[3]

    ins = [x, masks]
    for i in range(n_layers):
        w_hwio = params["conv_w"][i]                             # (3,3,Cin,Cout)
        cin, cout = w_hwio.shape[2], w_hwio.shape[3]
        # Fold taps: (3,3,Cin,Cout) -> (Cout, 9*Cin), tap-major then cin
        # (matches the in-kernel concat order).
        w_fold = jnp.transpose(w_hwio.reshape(9, cin, cout),
                               (2, 0, 1)).reshape(cout, 9 * cin)
        ins += [w_fold,
                params["conv_b"][i].reshape(cout, 1),
                params["bn_gamma"][i].reshape(cout, 1),
                params["bn_beta"][i].reshape(cout, 1)]

    rw = jnp.transpose(params["res_w"].reshape(Cin0, Cout), (1, 0))   # (Cout, Cin0)
    rb = params["res_b"].reshape(Cout, 1)
    ins += [rw, rb]

    kernel = functools.partial(_resblock_kernel, W=W, n_layers=n_layers,
                               norm=norm, eps=eps)
    # Single invocation (no grid): every operand is tiny and lives whole in VMEM.
    out = pl.pallas_call(
        kernel,
        out_shape=jax.ShapeDtypeStruct((Cout, NS), jnp.float32),
    )(*ins)

    # (Cout, N*H*W) -> NCHW.
    return jnp.transpose(out.reshape(Cout, N, H, W), (1, 0, 2, 3))


def resblock_forward_ref(x_nchw, params, *, norm=True, eps=1e-5):
    """Pure-JAX reference mirroring the PyTorch module (training-mode BN)."""
    x = jnp.transpose(x_nchw, (0, 2, 3, 1)).astype(jnp.float32)
    dn = ("NHWC", "HWIO", "NHWC")
    n_layers = len(params["conv_w"])
    h = x
    for i in range(n_layers):
        h = lax.conv_general_dilated(h, params["conv_w"][i], (1, 1), "SAME",
                                     dimension_numbers=dn) + params["conv_b"][i]
        if norm:
            mean = jnp.mean(h, axis=(0, 1, 2))
            var = jnp.var(h, axis=(0, 1, 2))
            h = ((h - mean) * lax.rsqrt(var + eps) * params["bn_gamma"][i]
                 + params["bn_beta"][i])
        if i + 1 < n_layers:
            h = jnp.maximum(h, 0.0)
    r = lax.conv_general_dilated(x, params["res_w"], (1, 1), "SAME",
                                 dimension_numbers=dn) + params["res_b"]
    out = jnp.maximum(h + r, 0.0)
    return jnp.transpose(out, (0, 3, 1, 2))


def init_params(key, in_channels, out_channels, depth):
    """Deterministic synthetic parameters with the module's shapes (HWIO weights)."""
    n_layers = max(depth, 0) + 1
    keys = jax.random.split(key, 4 * n_layers + 2)
    conv_w, conv_b, bn_g, bn_b = [], [], [], []
    for i in range(n_layers):
        cin = in_channels if i == 0 else out_channels
        k0, k1, k2, k3 = keys[4 * i:4 * i + 4]
        conv_w.append(0.1 * jax.random.normal(k0, (3, 3, cin, out_channels),
                                              jnp.float32))
        conv_b.append(0.1 * jax.random.normal(k1, (out_channels,), jnp.float32))
        bn_g.append(1.0 + 0.1 * jax.random.normal(k2, (out_channels,), jnp.float32))
        bn_b.append(0.1 * jax.random.normal(k3, (out_channels,), jnp.float32))
    res_w = 0.1 * jax.random.normal(keys[-2], (1, 1, in_channels, out_channels),
                                    jnp.float32)
    res_b = 0.1 * jax.random.normal(keys[-1], (out_channels,), jnp.float32)
    return {"conv_w": conv_w, "conv_b": conv_b,
            "bn_gamma": bn_g, "bn_beta": bn_b,
            "res_w": res_w, "res_b": res_b}


if __name__ == "__main__":
    key = jax.random.PRNGKey(0)
    kx, kp = jax.random.split(key)

    N, Cin, Cout, H, W, depth = 2, 4, 8, 16, 16, 2
    x = jax.random.normal(kx, (N, Cin, H, W), jnp.float32)      # NCHW like PyTorch
    params = init_params(kp, Cin, Cout, depth)

    for norm in (True, False):
        out = jax.block_until_ready(resblock_forward(x, params, norm=norm))
        ref = jax.block_until_ready(resblock_forward_ref(x, params, norm=norm))
        assert out.shape == (N, Cout, H, W)
        err = float(jnp.max(jnp.abs(out - ref)))
        assert jnp.allclose(out, ref, rtol=2e-4, atol=2e-4), \
            f"norm={norm}: max abs err {err}"

    print("KERNEL_OK")
</pallas_src>

<mosaic_0001>
module attributes {stable_mosaic.version = 11 : i64} {
  func.func @_resblock_kernel(%arg0: memref<4x512xf32, #tpu.memory_space<vmem>>, %arg1: memref<9x512xf32, #tpu.memory_space<vmem>>, %arg2: memref<8x36xf32, #tpu.memory_space<vmem>>, %arg3: memref<8x1xf32, #tpu.memory_space<vmem>>, %arg4: memref<8x1xf32, #tpu.memory_space<vmem>>, %arg5: memref<8x1xf32, #tpu.memory_space<vmem>>, %arg6: memref<8x72xf32, #tpu.memory_space<vmem>>, %arg7: memref<8x1xf32, #tpu.memory_space<vmem>>, %arg8: memref<8x1xf32, #tpu.memory_space<vmem>>, %arg9: memref<8x1xf32, #tpu.memory_space<vmem>>, %arg10: memref<8x72xf32, #tpu.memory_space<vmem>>, %arg11: memref<8x1xf32, #tpu.memory_space<vmem>>, %arg12: memref<8x1xf32, #tpu.memory_space<vmem>>, %arg13: memref<8x1xf32, #tpu.memory_space<vmem>>, %arg14: memref<8x4xf32, #tpu.memory_space<vmem>>, %arg15: memref<8x1xf32, #tpu.memory_space<vmem>>, %arg16: memref<8x512xf32, #tpu.memory_space<vmem>>) attributes {dimension_semantics = [], scalar_prefetch = 0 : i64, scratch_operands = 0 : i64, tpu.core_type = #tpu.core_type<tc>} {
    %c0 = arith.constant 0 : index
    %c0_0 = arith.constant 0 : index
    %0 = vector.load %arg1[%c0, %c0_0] : memref<9x512xf32, #tpu.memory_space<vmem>>, vector<9x512xf32>
    %c0_1 = arith.constant 0 : index
    %c0_2 = arith.constant 0 : index
    %1 = vector.load %arg0[%c0_1, %c0_2] : memref<4x512xf32, #tpu.memory_space<vmem>>, vector<4x512xf32>
    %c17_i32 = arith.constant 17 : i32
    %2 = tpu.dynamic_rotate %1 by %c17_i32 dim 1 : vector<4x512xf32>, i32 -> vector<4x512xf32>
    %3 = vector.extract_strided_slice %0 {offsets = [0, 0], sizes = [1, 512], strides = [1, 1]} : vector<9x512xf32> to vector<1x512xf32>
    %4 = vector.broadcast %3 : vector<1x512xf32> to vector<4x512xf32>
    %5 = arith.mulf %2, %4 : vector<4x512xf32>
    %c16_i32 = arith.constant 16 : i32
    %6 = tpu.dynamic_rotate %1 by %c16_i32 dim 1 : vector<4x512xf32>, i32 -> vector<4x512xf32>
    %7 = vector.extract_strided_slice %0 {offsets = [1, 0], sizes = [1, 512], strides = [1, 1]} : vector<9x512xf32> to vector<1x512xf32>
    %8 = vector.broadcast %7 : vector<1x512xf32> to vector<4x512xf32>
    %9 = arith.mulf %6, %8 : vector<4x512xf32>
    %c15_i32 = arith.constant 15 : i32
    %10 = tpu.dynamic_rotate %1 by %c15_i32 dim 1 : vector<4x512xf32>, i32 -> vector<4x512xf32>
    %11 = vector.extract_strided_slice %0 {offsets = [2, 0], sizes = [1, 512], strides = [1, 1]} : vector<9x512xf32> to vector<1x512xf32>
    %12 = vector.broadcast %11 : vector<1x512xf32> to vector<4x512xf32>
    %13 = arith.mulf %10, %12 : vector<4x512xf32>
    %c1_i32 = arith.constant 1 : i32
    %14 = tpu.dynamic_rotate %1 by %c1_i32 dim 1 : vector<4x512xf32>, i32 -> vector<4x512xf32>
    %15 = vector.extract_strided_slice %0 {offsets = [3, 0], sizes = [1, 512], strides = [1, 1]} : vector<9x512xf32> to vector<1x512xf32>
    %16 = vector.broadcast %15 : vector<1x512xf32> to vector<4x512xf32>
    %17 = arith.mulf %14, %16 : vector<4x512xf32>
    %18 = vector.extract_strided_slice %0 {offsets = [4, 0], sizes = [1, 512], strides = [1, 1]} : vector<9x512xf32> to vector<1x512xf32>
    %19 = vector.broadcast %18 : vector<1x512xf32> to vector<4x512xf32>
    %20 = arith.mulf %1, %19 : vector<4x512xf32>
    %c511_i32 = arith.constant 511 : i32
    %21 = tpu.dynamic_rotate %1 by %c511_i32 dim 1 : vector<4x512xf32>, i32 -> vector<4x512xf32>
    %22 = vector.extract_strided_slice %0 {offsets = [5, 0], sizes = [1, 512], strides = [1, 1]} : vector<9x512xf32> to vector<1x512xf32>
    %23 = vector.broadcast %22 : vector<1x512xf32> to vector<4x512xf32>
    %24 = arith.mulf %21, %23 : vector<4x512xf32>
    %c497_i32 = arith.constant 497 : i32
    %25 = tpu.dynamic_rotate %1 by %c497_i32 dim 1 : vector<4x512xf32>, i32 -> vector<4x512xf32>
    %26 = vector.extract_strided_slice %0 {offsets = [6, 0], sizes = [1, 512], strides = [1, 1]} : vector<9x512xf32> to vector<1x512xf32>
    %27 = vector.broadcast %26 : vector<1x512xf32> to vector<4x512xf32>
    %28 = arith.mulf %25, %27 : vector<4x512xf32>
    %c496_i32 = arith.constant 496 : i32
    %29 = tpu.dynamic_rotate %1 by %c496_i32 dim 1 : vector<4x512xf32>, i32 -> vector<4x512xf32>
    %30 = vector.extract_strided_slice %0 {offsets = [7, 0], sizes = [1, 512], strides = [1, 1]} : vector<9x512xf32> to vector<1x512xf32>
    %31 = vector.broadcast %30 : vector<1x512xf32> to vector<4x512xf32>
    %32 = arith.mulf %29, %31 : vector<4x512xf32>
    %c495_i32 = arith.constant 495 : i32
    %33 = tpu.dynamic_rotate %1 by %c495_i32 dim 1 : vector<4x512xf32>, i32 -> vector<4x512xf32>
    %34 = vector.extract_strided_slice %0 {offsets = [8, 0], sizes = [1, 512], strides = [1, 1]} : vector<9x512xf32> to vector<1x512xf32>
    %35 = vector.broadcast %34 : vector<1x512xf32> to vector<4x512xf32>
    %36 = arith.mulf %33, %35 : vector<4x512xf32>
    %37 = tpu.concatenate %5, %9, %13, %17, %20, %24, %28, %32, %36 in 0 : vector<4x512xf32>, vector<4x512xf32>, vector<4x512xf32>, vector<4x512xf32>, vector<4x512xf32>, vector<4x512xf32>, vector<4x512xf32>, vector<4x512xf32>, vector<4x512xf32> -> vector<36x512xf32>
    %c0_3 = arith.constant 0 : index
    %c0_4 = arith.constant 0 : index
    %38 = vector.load %arg2[%c0_3, %c0_4] : memref<8x36xf32, #tpu.memory_space<vmem>>, vector<8x36xf32>
    %cst = arith.constant dense<0.000000e+00> : vector<8x512xf32>
    %39 = tpu.matmul %38, %37, %cst {dimension_numbers = #tpu.dot_dimension_numbers<[1], [0], [0], [1], [0, 0, 1, 1], [], []>} : vector<8x36xf32>, vector<36x512xf32>, vector<8x512xf32> -> vector<8x512xf32>
    %c0_5 = arith.constant 0 : index
    %c0_6 = arith.constant 0 : index
    %40 = vector.load %arg3[%c0_5, %c0_6] : memref<8x1xf32, #tpu.memory_space<vmem>>, vector<8x1xf32>
    %41 = vector.broadcast %40 : vector<8x1xf32> to vector<8x512xf32>
    %42 = arith.addf %39, %41 : vector<8x512xf32>
    %cst_7 = arith.constant dense<0.000000e+00> : vector<8xf32>
    %43 = vector.multi_reduction <add>, %42, %cst_7 [1] : vector<8x512xf32> to vector<8xf32>
    %44 = vector.shape_cast %43 : vector<8xf32> to vector<8x1xf32>
    %cst_8 = arith.constant 5.120000e+02 : f32
    %45 = vector.broadcast %cst_8 : f32 to vector<8x1xf32>
    %46 = arith.divf %44, %45 : vector<8x1xf32>
    %47 = arith.mulf %42, %42 : vector<8x512xf32>
    %cst_9 = arith.constant dense<0.000000e+00> : vector<8xf32>
    %48 = vector.multi_reduction <add>, %47, %cst_9 [1] : vector<8x512xf32> to vector<8xf32>
    %49 = vector.shape_cast %48 : vector<8xf32> to vector<8x1xf32>
    %cst_10 = arith.constant 5.120000e+02 : f32
    %50 = vector.broadcast %cst_10 : f32 to vector<8x1xf32>
    %51 = arith.divf %49, %50 : vector<8x1xf32>
    %52 = arith.mulf %46, %46 : vector<8x1xf32>
    %53 = arith.subf %51, %52 : vector<8x1xf32>
    %cst_11 = arith.constant 0.000000e+00 : f32
    %54 = vector.broadcast %cst_11 : f32 to vector<8x1xf32>
    %55 = arith.maximumf %53, %54 : vector<8x1xf32>
    %c0_12 = arith.constant 0 : index
    %c0_13 = arith.constant 0 : index
    %56 = vector.load %arg4[%c0_12, %c0_13] : memref<8x1xf32, #tpu.memory_space<vmem>>, vector<8x1xf32>
    %cst_14 = arith.constant 9.99999974E-6 : f32
    %57 = vector.broadcast %cst_14 : f32 to vector<8x1xf32>
    %58 = arith.addf %55, %57 : vector<8x1xf32>
    %59 = math.rsqrt %58 : vector<8x1xf32>
    %60 = arith.mulf %56, %59 : vector<8x1xf32>
    %61 = vector.broadcast %60 : vector<8x1xf32> to vector<8x512xf32>
    %62 = arith.mulf %42, %61 : vector<8x512xf32>
    %c0_15 = arith.constant 0 : index
    %c0_16 = arith.constant 0 : index
    %63 = vector.load %arg5[%c0_15, %c0_16] : memref<8x1xf32, #tpu.memory_space<vmem>>, vector<8x1xf32>
    %64 = arith.mulf %46, %60 : vector<8x1xf32>
    %65 = arith.subf %63, %64 : vector<8x1xf32>
    %66 = vector.broadcast %65 : vector<8x1xf32> to vector<8x512xf32>
    %67 = arith.addf %62, %66 : vector<8x512xf32>
    %cst_17 = arith.constant 0.000000e+00 : f32
    %68 = vector.broadcast %cst_17 : f32 to vector<8x512xf32>
    %69 = arith.maximumf %67, %68 : vector<8x512xf32>
    %c17_i32_18 = arith.constant 17 : i32
    %70 = tpu.dynamic_rotate %69 by %c17_i32_18 dim 1 : vector<8x512xf32>, i32 -> vector<8x512xf32>
    %71 = vector.extract_strided_slice %0 {offsets = [0, 0], sizes = [1, 512], strides = [1, 1]} : vector<9x512xf32> to vector<1x512xf32>
    %72 = vector.broadcast %71 : vector<1x512xf32> to vector<8x512xf32>
    %73 = arith.mulf %70, %72 : vector<8x512xf32>
    %c16_i32_19 = arith.constant 16 : i32
    %74 = tpu.dynamic_rotate %69 by %c16_i32_19 dim 1 : vector<8x512xf32>, i32 -> vector<8x512xf32>
    %75 = vector.extract_strided_slice %0 {offsets = [1, 0], sizes = [1, 512], strides = [1, 1]} : vector<9x512xf32> to vector<1x512xf32>
    %76 = vector.broadcast %75 : vector<1x512xf32> to vector<8x512xf32>
    %77 = arith.mulf %74, %76 : vector<8x512xf32>
    %c15_i32_20 = arith.constant 15 : i32
    %78 = tpu.dynamic_rotate %69 by %c15_i32_20 dim 1 : vector<8x512xf32>, i32 -> vector<8x512xf32>
    %79 = vector.extract_strided_slice %0 {offsets = [2, 0], sizes = [1, 512], strides = [1, 1]} : vector<9x512xf32> to vector<1x512xf32>
    %80 = vector.broadcast %79 : vector<1x512xf32> to vector<8x512xf32>
    %81 = arith.mulf %78, %80 : vector<8x512xf32>
    %c1_i32_21 = arith.constant 1 : i32
    %82 = tpu.dynamic_rotate %69 by %c1_i32_21 dim 1 : vector<8x512xf32>, i32 -> vector<8x512xf32>
    %83 = vector.extract_strided_slice %0 {offsets = [3, 0], sizes = [1, 512], strides = [1, 1]} : vector<9x512xf32> to vector<1x512xf32>
    %84 = vector.broadcast %83 : vector<1x512xf32> to vector<8x512xf32>
    %85 = arith.mulf %82, %84 : vector<8x512xf32>
    %86 = vector.extract_strided_slice %0 {offsets = [4, 0], sizes = [1, 512], strides = [1, 1]} : vector<9x512xf32> to vector<1x512xf32>
    %87 = vector.broadcast %86 : vector<1x512xf32> to vector<8x512xf32>
    %88 = arith.mulf %69, %87 : vector<8x512xf32>
    %c511_i32_22 = arith.constant 511 : i32
    %89 = tpu.dynamic_rotate %69 by %c511_i32_22 dim 1 : vector<8x512xf32>, i32 -> vector<8x512xf32>
    %90 = vector.extract_strided_slice %0 {offsets = [5, 0], sizes = [1, 512], strides = [1, 1]} : vector<9x512xf32> to vector<1x512xf32>
    %91 = vector.broadcast %90 : vector<1x512xf32> to vector<8x512xf32>
    %92 = arith.mulf %89, %91 : vector<8x512xf32>
    %c497_i32_23 = arith.constant 497 : i32
    %93 = tpu.dynamic_rotate %69 by %c497_i32_23 dim 1 : vector<8x512xf32>, i32 -> vector<8x512xf32>
    %94 = vector.extract_strided_slice %0 {offsets = [6, 0], sizes = [1, 512], strides = [1, 1]} : vector<9x512xf32> to vector<1x512xf32>
    %95 = vector.broadcast %94 : vector<1x512xf32> to vector<8x512xf32>
    %96 = arith.mulf %93, %95 : vector<8x512xf32>
    %c496_i32_24 = arith.constant 496 : i32
    %97 = tpu.dynamic_rotate %69 by %c496_i32_24 dim 1 : vector<8x512xf32>, i32 -> vector<8x512xf32>
    %98 = vector.extract_strided_slice %0 {offsets = [7, 0], sizes = [1, 512], strides = [1, 1]} : vector<9x512xf32> to vector<1x512xf32>
    %99 = vector.broadcast %98 : vector<1x512xf32> to vector<8x512xf32>
    %100 = arith.mulf %97, %99 : vector<8x512xf32>
    %c495_i32_25 = arith.constant 495 : i32
    %101 = tpu.dynamic_rotate %69 by %c495_i32_25 dim 1 : vector<8x512xf32>, i32 -> vector<8x512xf32>
    %102 = vector.extract_strided_slice %0 {offsets = [8, 0], sizes = [1, 512], strides = [1, 1]} : vector<9x512xf32> to vector<1x512xf32>
    %103 = vector.broadcast %102 : vector<1x512xf32> to vector<8x512xf32>
    %104 = arith.mulf %101, %103 : vector<8x512xf32>
    %105 = tpu.concatenate %73, %77, %81, %85, %88, %92, %96, %100, %104 in 0 : vector<8x512xf32>, vector<8x512xf32>, vector<8x512xf32>, vector<8x512xf32>, vector<8x512xf32>, vector<8x512xf32>, vector<8x512xf32>, vector<8x512xf32>, vector<8x512xf32> -> vector<72x512xf32>
    %c0_26 = arith.constant 0 : index
    %c0_27 = arith.constant 0 : index
    %106 = vector.load %arg6[%c0_26, %c0_27] : memref<8x72xf32, #tpu.memory_space<vmem>>, vector<8x72xf32>
    %cst_28 = arith.constant dense<0.000000e+00> : vector<8x512xf32>
    %107 = tpu.matmul %106, %105, %cst_28 {dimension_numbers = #tpu.dot_dimension_numbers<[1], [0], [0], [1], [0, 0, 1, 1], [], []>} : vector<8x72xf32>, vector<72x512xf32>, vector<8x512xf32> -> vector<8x512xf32>
    %c0_29 = arith.constant 0 : index
    %c0_30 = arith.constant 0 : index
    %108 = vector.load %arg7[%c0_29, %c0_30] : memref<8x1xf32, #tpu.memory_space<vmem>>, vector<8x1xf32>
    %109 = vector.broadcast %108 : vector<8x1xf32> to vector<8x512xf32>
    %110 = arith.addf %107, %109 : vector<8x512xf32>
    %cst_31 = arith.constant dense<0.000000e+00> : vector<8xf32>
    %111 = vector.multi_reduction <add>, %110, %cst_31 [1] : vector<8x512xf32> to vector<8xf32>
    %112 = vector.shape_cast %111 : vector<8xf32> to vector<8x1xf32>
    %cst_32 = arith.constant 5.120000e+02 : f32
    %113 = vector.broadcast %cst_32 : f32 to vector<8x1xf32>
    %114 = arith.divf %112, %113 : vector<8x1xf32>
    %115 = arith.mulf %110, %110 : vector<8x512xf32>
    %cst_33 = arith.constant dense<0.000000e+00> : vector<8xf32>
    %116 = vector.multi_reduction <add>, %115, %cst_33 [1] : vector<8x512xf32> to vector<8xf32>
    %117 = vector.shape_cast %116 : vector<8xf32> to vector<8x1xf32>
    %cst_34 = arith.constant 5.120000e+02 : f32
    %118 = vector.broadcast %cst_34 : f32 to vector<8x1xf32>
    %119 = arith.divf %117, %118 : vector<8x1xf32>
    %120 = arith.mulf %114, %114 : vector<8x1xf32>
    %121 = arith.subf %119, %120 : vector<8x1xf32>
    %cst_35 = arith.constant 0.000000e+00 : f32
    %122 = vector.broadcast %cst_35 : f32 to vector<8x1xf32>
    %123 = arith.maximumf %121, %122 : vector<8x1xf32>
    %c0_36 = arith.constant 0 : index
    %c0_37 = arith.constant 0 : index
    %124 = vector.load %arg8[%c0_36, %c0_37] : memref<8x1xf32, #tpu.memory_space<vmem>>, vector<8x1xf32>
    %cst_38 = arith.constant 9.99999974E-6 : f32
    %125 = vector.broadcast %cst_38 : f32 to vector<8x1xf32>
    %126 = arith.addf %123, %125 : vector<8x1xf32>
    %127 = math.rsqrt %126 : vector<8x1xf32>
    %128 = arith.mulf %124, %127 : vector<8x1xf32>
    %129 = vector.broadcast %128 : vector<8x1xf32> to vector<8x512xf32>
    %130 = arith.mulf %110, %129 : vector<8x512xf32>
    %c0_39 = arith.constant 0 : index
    %c0_40 = arith.constant 0 : index
    %131 = vector.load %arg9[%c0_39, %c0_40] : memref<8x1xf32, #tpu.memory_space<vmem>>, vector<8x1xf32>
    %132 = arith.mulf %114, %128 : vector<8x1xf32>
    %133 = arith.subf %131, %132 : vector<8x1xf32>
    %134 = vector.broadcast %133 : vector<8x1xf32> to vector<8x512xf32>
    %135 = arith.addf %130, %134 : vector<8x512xf32>
    %cst_41 = arith.constant 0.000000e+00 : f32
    %136 = vector.broadcast %cst_41 : f32 to vector<8x512xf32>
    %137 = arith.maximumf %135, %136 : vector<8x512xf32>
    %c17_i32_42 = arith.constant 17 : i32
    %138 = tpu.dynamic_rotate %137 by %c17_i32_42 dim 1 : vector<8x512xf32>, i32 -> vector<8x512xf32>
    %139 = vector.extract_strided_slice %0 {offsets = [0, 0], sizes = [1, 512], strides = [1, 1]} : vector<9x512xf32> to vector<1x512xf32>
    %140 = vector.broadcast %139 : vector<1x512xf32> to vector<8x512xf32>
    %141 = arith.mulf %138, %140 : vector<8x512xf32>
    %c16_i32_43 = arith.constant 16 : i32
    %142 = tpu.dynamic_rotate %137 by %c16_i32_43 dim 1 : vector<8x512xf32>, i32 -> vector<8x512xf32>
    %143 = vector.extract_strided_slice %0 {offsets = [1, 0], sizes = [1, 512], strides = [1, 1]} : vector<9x512xf32> to vector<1x512xf32>
    %144 = vector.broadcast %143 : vector<1x512xf32> to vector<8x512xf32>
    %145 = arith.mulf %142, %144 : vector<8x512xf32>
    %c15_i32_44 = arith.constant 15 : i32
    %146 = tpu.dynamic_rotate %137 by %c15_i32_44 dim 1 : vector<8x512xf32>, i32 -> vector<8x512xf32>
    %147 = vector.extract_strided_slice %0 {offsets = [2, 0], sizes = [1, 512], strides = [1, 1]} : vector<9x512xf32> to vector<1x512xf32>
    %148 = vector.broadcast %147 : vector<1x512xf32> to vector<8x512xf32>
    %149 = arith.mulf %146, %148 : vector<8x512xf32>
    %c1_i32_45 = arith.constant 1 : i32
    %150 = tpu.dynamic_rotate %137 by %c1_i32_45 dim 1 : vector<8x512xf32>, i32 -> vector<8x512xf32>
    %151 = vector.extract_strided_slice %0 {offsets = [3, 0], sizes = [1, 512], strides = [1, 1]} : vector<9x512xf32> to vector<1x512xf32>
    %152 = vector.broadcast %151 : vector<1x512xf32> to vector<8x512xf32>
    %153 = arith.mulf %150, %152 : vector<8x512xf32>
    %154 = vector.extract_strided_slice %0 {offsets = [4, 0], sizes = [1, 512], strides = [1, 1]} : vector<9x512xf32> to vector<1x512xf32>
    %155 = vector.broadcast %154 : vector<1x512xf32> to vector<8x512xf32>
    %156 = arith.mulf %137, %155 : vector<8x512xf32>
    %c511_i32_46 = arith.constant 511 : i32
    %157 = tpu.dynamic_rotate %137 by %c511_i32_46 dim 1 : vector<8x512xf32>, i32 -> vector<8x512xf32>
    %158 = vector.extract_strided_slice %0 {offsets = [5, 0], sizes = [1, 512], strides = [1, 1]} : vector<9x512xf32> to vector<1x512xf32>
    %159 = vector.broadcast %158 : vector<1x512xf32> to vector<8x512xf32>
    %160 = arith.mulf %157, %159 : vector<8x512xf32>
    %c497_i32_47 = arith.constant 497 : i32
    %161 = tpu.dynamic_rotate %137 by %c497_i32_47 dim 1 : vector<8x512xf32>, i32 -> vector<8x512xf32>
    %162 = vector.extract_strided_slice %0 {offsets = [6, 0], sizes = [1, 512], strides = [1, 1]} : vector<9x512xf32> to vector<1x512xf32>
    %163 = vector.broadcast %162 : vector<1x512xf32> to vector<8x512xf32>
    %164 = arith.mulf %161, %163 : vector<8x512xf32>
    %c496_i32_48 = arith.constant 496 : i32
    %165 = tpu.dynamic_rotate %137 by %c496_i32_48 dim 1 : vector<8x512xf32>, i32 -> vector<8x512xf32>
    %166 = vector.extract_strided_slice %0 {offsets = [7, 0], sizes = [1, 512], strides = [1, 1]} : vector<9x512xf32> to vector<1x512xf32>
    %167 = vector.broadcast %166 : vector<1x512xf32> to vector<8x512xf32>
    %168 = arith.mulf %165, %167 : vector<8x512xf32>
    %c495_i32_49 = arith.constant 495 : i32
    %169 = tpu.dynamic_rotate %137 by %c495_i32_49 dim 1 : vector<8x512xf32>, i32 -> vector<8x512xf32>
    %170 = vector.extract_strided_slice %0 {offsets = [8, 0], sizes = [1, 512], strides = [1, 1]} : vector<9x512xf32> to vector<1x512xf32>
    %171 = vector.broadcast %170 : vector<1x512xf32> to vector<8x512xf32>
    %172 = arith.mulf %169, %171 : vector<8x512xf32>
    %173 = tpu.concatenate %141, %145, %149, %153, %156, %160, %164, %168, %172 in 0 : vector<8x512xf32>, vector<8x512xf32>, vector<8x512xf32>, vector<8x512xf32>, vector<8x512xf32>, vector<8x512xf32>, vector<8x512xf32>, vector<8x512xf32>, vector<8x512xf32> -> vector<72x512xf32>
    %c0_50 = arith.constant 0 : index
    %c0_51 = arith.constant 0 : index
    %174 = vector.load %arg10[%c0_50, %c0_51] : memref<8x72xf32, #tpu.memory_space<vmem>>, vector<8x72xf32>
    %cst_52 = arith.constant dense<0.000000e+00> : vector<8x512xf32>
    %175 = tpu.matmul %174, %173, %cst_52 {dimension_numbers = #tpu.dot_dimension_numbers<[1], [0], [0], [1], [0, 0, 1, 1], [], []>} : vector<8x72xf32>, vector<72x512xf32>, vector<8x512xf32> -> vector<8x512xf32>
    %c0_53 = arith.constant 0 : index
    %c0_54 = arith.constant 0 : index
    %176 = vector.load %arg11[%c0_53, %c0_54] : memref<8x1xf32, #tpu.memory_space<vmem>>, vector<8x1xf32>
    %177 = vector.broadcast %176 : vector<8x1xf32> to vector<8x512xf32>
    %178 = arith.addf %175, %177 : vector<8x512xf32>
    %cst_55 = arith.constant dense<0.000000e+00> : vector<8xf32>
    %179 = vector.multi_reduction <add>, %178, %cst_55 [1] : vector<8x512xf32> to vector<8xf32>
    %180 = vector.shape_cast %179 : vector<8xf32> to vector<8x1xf32>
    %cst_56 = arith.constant 5.120000e+02 : f32
    %181 = vector.broadcast %cst_56 : f32 to vector<8x1xf32>
    %182 = arith.divf %180, %181 : vector<8x1xf32>
    %183 = arith.mulf %178, %178 : vector<8x512xf32>
    %cst_57 = arith.constant dense<0.000000e+00> : vector<8xf32>
    %184 = vector.multi_reduction <add>, %183, %cst_57 [1] : vector<8x512xf32> to vector<8xf32>
    %185 = vector.shape_cast %184 : vector<8xf32> to vector<8x1xf32>
    %cst_58 = arith.constant 5.120000e+02 : f32
    %186 = vector.broadcast %cst_58 : f32 to vector<8x1xf32>
    %187 = arith.divf %185, %186 : vector<8x1xf32>
    %188 = arith.mulf %182, %182 : vector<8x1xf32>
    %189 = arith.subf %187, %188 : vector<8x1xf32>
    %cst_59 = arith.constant 0.000000e+00 : f32
    %190 = vector.broadcast %cst_59 : f32 to vector<8x1xf32>
    %191 = arith.maximumf %189, %190 : vector<8x1xf32>
    %c0_60 = arith.constant 0 : index
    %c0_61 = arith.constant 0 : index
    %192 = vector.load %arg12[%c0_60, %c0_61] : memref<8x1xf32, #tpu.memory_space<vmem>>, vector<8x1xf32>
    %cst_62 = arith.constant 9.99999974E-6 : f32
    %193 = vector.broadcast %cst_62 : f32 to vector<8x1xf32>
    %194 = arith.addf %191, %193 : vector<8x1xf32>
    %195 = math.rsqrt %194 : vector<8x1xf32>
    %196 = arith.mulf %192, %195 : vector<8x1xf32>
    %197 = vector.broadcast %196 : vector<8x1xf32> to vector<8x512xf32>
    %198 = arith.mulf %178, %197 : vector<8x512xf32>
    %c0_63 = arith.constant 0 : index
    %c0_64 = arith.constant 0 : index
    %199 = vector.load %arg13[%c0_63, %c0_64] : memref<8x1xf32, #tpu.memory_space<vmem>>, vector<8x1xf32>
    %200 = arith.mulf %182, %196 : vector<8x1xf32>
    %201 = arith.subf %199, %200 : vector<8x1xf32>
    %202 = vector.broadcast %201 : vector<8x1xf32> to vector<8x512xf32>
    %203 = arith.addf %198, %202 : vector<8x512xf32>
    %c0_65 = arith.constant 0 : index
    %c0_66 = arith.constant 0 : index
    %204 = vector.load %arg14[%c0_65, %c0_66] : memref<8x4xf32, #tpu.memory_space<vmem>>, vector<8x4xf32>
    %cst_67 = arith.constant dense<0.000000e+00> : vector<8x512xf32>
    %205 = tpu.matmul %204, %1, %cst_67 {dimension_numbers = #tpu.dot_dimension_numbers<[1], [0], [0], [1], [0, 0, 1, 1], [], []>} : vector<8x4xf32>, vector<4x512xf32>, vector<8x512xf32> -> vector<8x512xf32>
    %c0_68 = arith.constant 0 : index
    %c0_69 = arith.constant 0 : index
    %206 = vector.load %arg15[%c0_68, %c0_69] : memref<8x1xf32, #tpu.memory_space<vmem>>, vector<8x1xf32>
    %207 = vector.broadcast %206 : vector<8x1xf32> to vector<8x512xf32>
    %208 = arith.addf %205, %207 : vector<8x512xf32>
    %209 = arith.addf %203, %208 : vector<8x512xf32>
    %cst_70 = arith.constant 0.000000e+00 : f32
    %210 = vector.broadcast %cst_70 : f32 to vector<8x512xf32>
    %211 = arith.maximumf %209, %210 : vector<8x512xf32>
    %c0_71 = arith.constant 0 : index
    %c0_72 = arith.constant 0 : index
    %212 = vector.load %arg16[%c0_71, %c0_72] : memref<8x512xf32, #tpu.memory_space<vmem>>, vector<8x512xf32>
    tpu.vector_store %arg16[%c0_71, %c0_72], %211 {strides = array<i32>} : memref<8x512xf32, #tpu.memory_space<vmem>>, vector<8x512xf32>,
    return
  }
}

</mosaic_0001>

<llo_original>
// kernel: tpu_custom_call.1
$region0: #{tpu_custom_call.1}
  #allocation0 [shape = 'u32[]', space=smem, size = 0x4, offset = 0x4, fixed_abs, tag = 'smem constant byte address 0x4 - core index']
  #allocation1 [shape = 'u32[144,128]{1,0:T(1,128)}', space=vmem, size = 0x12000, scoped, tag = 'internal scratch']
  %s0 = inlined_call_operand.vmem [shape: f32[4,512], index: 0, kind: input, shape index: {}]
  %s1 = inlined_call_operand.vmem [shape: f32[9,512], index: 1, kind: input, shape index: {}]
  %s2 = inlined_call_operand.vmem [shape: f32[8,36], index: 2, kind: input, shape index: {}]
  %s3 = inlined_call_operand.vmem [shape: f32[8,1], index: 3, kind: input, shape index: {}]
  %s4 = inlined_call_operand.vmem [shape: f32[8,1], index: 4, kind: input, shape index: {}]
  %s5 = inlined_call_operand.vmem [shape: f32[8,1], index: 5, kind: input, shape index: {}]
  %s6 = inlined_call_operand.vmem [shape: f32[8,72], index: 6, kind: input, shape index: {}]
  %s7 = inlined_call_operand.vmem [shape: f32[8,1], index: 7, kind: input, shape index: {}]
  %s8 = inlined_call_operand.vmem [shape: f32[8,1], index: 8, kind: input, shape index: {}]
  %s9 = inlined_call_operand.vmem [shape: f32[8,1], index: 9, kind: input, shape index: {}]
  %s10 = inlined_call_operand.vmem [shape: f32[8,72], index: 10, kind: input, shape index: {}]
  %s11 = inlined_call_operand.vmem [shape: f32[8,1], index: 11, kind: input, shape index: {}]
  %s12 = inlined_call_operand.vmem [shape: f32[8,1], index: 12, kind: input, shape index: {}]
  %s13 = inlined_call_operand.vmem [shape: f32[8,1], index: 13, kind: input, shape index: {}]
  %s14 = inlined_call_operand.vmem [shape: f32[8,4], index: 14, kind: input, shape index: {}]
  %s15 = inlined_call_operand.vmem [shape: f32[8,1], index: 15, kind: input, shape index: {}]
  %s16 = inlined_call_operand.hbm [shape: f32[8,512], index: 16, kind: output, shape index: {}]
  %s17 = sld [smem:[#allocation0]]
  $region74: #{tpu_custom_call.1} parent=0
    _
  %s19 = ssub.s32 1, %s17
  %s20 = scalar_select 0, %s19, %s17
  $region1: #{tpu_custom_call.1} parent=0
    #allocation2 [shape = 'u8[16384]{0}', space=vmem, size = 0x4000, scoped, tag = 'output window, operand 0, single buffered']
    #allocation3 [shape = 's32[1]{0}', space=sflag, size = 0x4, scoped, tag = 'scoped memory for tpu_custom_call.1']
    %21 = vsyncpa [#allocation3], 0
    // Predicated region
    $region2: #{tpu_custom_call.1} parent=1 // pred_check
      _
    $region3: #{tpu_custom_call.1} parent=1 // pred_check_branch
      %23 = sbr.rel (0) target = $region5
    $region4: #{tpu_custom_call.1} parent=1 // pred_region
      _
    $region5: #{tpu_custom_call.1} parent=1 // pred_fallthru
      _
    // Predicated region
    $region6: #{tpu_custom_call.1} parent=1 // pred_check
      _
    $region7: #{tpu_custom_call.1} parent=1 // pred_check_branch
      %25 = sbr.rel (0) target = $region9
    $region8: #{tpu_custom_call.1} parent=1 // pred_region
      _
    $region9: #{tpu_custom_call.1} parent=1 // pred_fallthru
      _
    // Predicated region
    $region10: #{tpu_custom_call.1} parent=1 // pred_check
      _
    $region11: #{tpu_custom_call.1} parent=1 // pred_check_branch
      %27 = sbr.rel (0) target = $region13
    $region12: #{tpu_custom_call.1} parent=1 // pred_region
      _
    $region13: #{tpu_custom_call.1} parent=1 // pred_fallthru
      _
    // Predicated region
    $region14: #{tpu_custom_call.1} parent=1 // pred_check
      _
    $region15: #{tpu_custom_call.1} parent=1 // pred_check_branch
      %29 = sbr.rel (0) target = $region17
    $region16: #{tpu_custom_call.1} parent=1 // pred_region
      _
    $region17: #{tpu_custom_call.1} parent=1 // pred_fallthru
      _
    // Predicated region
    $region18: #{tpu_custom_call.1} parent=1 // pred_check
      _
    $region19: #{tpu_custom_call.1} parent=1 // pred_check_branch
      %31 = sbr.rel (0) target = $region21
    $region20: #{tpu_custom_call.1} parent=1 // pred_region
      _
    $region21: #{tpu_custom_call.1} parent=1 // pred_fallthru
      _
    // Predicated region
    $region22: #{tpu_custom_call.1} parent=1 // pred_check
      _
    $region23: #{tpu_custom_call.1} parent=1 // pred_check_branch
      %33 = sbr.rel (0) target = $region25
    $region24: #{tpu_custom_call.1} parent=1 // pred_region
      _
    $region25: #{tpu_custom_call.1} parent=1 // pred_fallthru
      _
    // Predicated region
    $region26: #{tpu_custom_call.1} parent=1 // pred_check
      _
    $region27: #{tpu_custom_call.1} parent=1 // pred_check_branch
      %35 = sbr.rel (0) target = $region29
    $region28: #{tpu_custom_call.1} parent=1 // pred_region
      _
    $region29: #{tpu_custom_call.1} parent=1 // pred_fallthru
      _
    // Predicated region
    $region30: #{tpu_custom_call.1} parent=1 // pred_check
      _
    $region31: #{tpu_custom_call.1} parent=1 // pred_check_branch
      %37 = sbr.rel (0) target = $region33
    $region32: #{tpu_custom_call.1} parent=1 // pred_region
      _
    $region33: #{tpu_custom_call.1} parent=1 // pred_fallthru
      _
    // Predicated region
    $region34: #{tpu_custom_call.1} parent=1 // pred_check
      _
    $region35: #{tpu_custom_call.1} parent=1 // pred_check_branch
      %39 = sbr.rel (0) target = $region37
    $region36: #{tpu_custom_call.1} parent=1 // pred_region
      _
    $region37: #{tpu_custom_call.1} parent=1 // pred_fallthru
      _
    // Predicated region
    $region38: #{tpu_custom_call.1} parent=1 // pred_check
      _
    $region39: #{tpu_custom_call.1} parent=1 // pred_check_branch
      %41 = sbr.rel (0) target = $region41
    $region40: #{tpu_custom_call.1} parent=1 // pred_region
      _
    $region41: #{tpu_custom_call.1} parent=1 // pred_fallthru
      _
    // Predicated region
    $region42: #{tpu_custom_call.1} parent=1 // pred_check
      _
    $region43: #{tpu_custom_call.1} parent=1 // pred_check_branch
      %43 = sbr.rel (0) target = $region45
    $region44: #{tpu_custom_call.1} parent=1 // pred_region
      _
    $region45: #{tpu_custom_call.1} parent=1 // pred_fallthru
      _
    // Predicated region
    $region46: #{tpu_custom_call.1} parent=1 // pred_check
      _
    $region47: #{tpu_custom_call.1} parent=1 // pred_check_branch
      %45 = sbr.rel (0) target = $region49
    $region48: #{tpu_custom_call.1} parent=1 // pred_region
      _
    $region49: #{tpu_custom_call.1} parent=1 // pred_fallthru
      _
    // Predicated region
    $region50: #{tpu_custom_call.1} parent=1 // pred_check
      _
    $region51: #{tpu_custom_call.1} parent=1 // pred_check_branch
      %47 = sbr.rel (0) target = $region53
    $region52: #{tpu_custom_call.1} parent=1 // pred_region
      _
    $region53: #{tpu_custom_call.1} parent=1 // pred_fallthru
      _
    // Predicated region
    $region54: #{tpu_custom_call.1} parent=1 // pred_check
      _
    $region55: #{tpu_custom_call.1} parent=1 // pred_check_branch
      %49 = sbr.rel (0) target = $region57
    $region56: #{tpu_custom_call.1} parent=1 // pred_region
      _
    $region57: #{tpu_custom_call.1} parent=1 // pred_fallthru
      _
    // Predicated region
    $region58: #{tpu_custom_call.1} parent=1 // pred_check
      _
    $region59: #{tpu_custom_call.1} parent=1 // pred_check_branch
      %51 = sbr.rel (0) target = $region61
    $region60: #{tpu_custom_call.1} parent=1 // pred_region
      _
    $region61: #{tpu_custom_call.1} parent=1 // pred_fallthru
      _
    // Predicated region
    $region62: #{tpu_custom_call.1} parent=1 // pred_check
      _
    $region63: #{tpu_custom_call.1} parent=1 // pred_check_branch
      %53 = sbr.rel (0) target = $region65
    $region64: #{tpu_custom_call.1} parent=1 // pred_region
      _
    $region65: #{tpu_custom_call.1} parent=1 // pred_fallthru
      _
    %v54 = vld [vmem:[%s1] sm:$0xff]
    %v55 = vld [vmem:[%s1 + $0x8] sm:$0xff]
    %v56 = vld [vmem:[%s1 + $0x10] sm:$0xff]
    %v57 = vld [vmem:[%s1 + $0x18] sm:$0xff]
    %v58 = vld [vmem:[%s1 + $0x20] sm:$0x1]
    %v59 = vld [vmem:[%s1 + $0x28] sm:$0x1]
    %v60 = vld [vmem:[%s1 + $0x30] sm:$0x1]
    %v61 = vld [vmem:[%s1 + $0x38] sm:$0x1]
    %v62 = vld [vmem:[%s0] sm:$0xff]
    %v63 = vld [vmem:[%s0 + $0x8] sm:$0xff]
    %v66 = vcombine.high %v62, %v62
    %v67 = vcombine.high %v63, %v63
    %70 = vrot.lane.b32.xlu0 %v62, 17
    %v71 = vpop.permute.xlu0 %70
    %72 = vrot.lane.b32.xlu0 %v66, 17
    %v73 = vpop.permute.xlu0 %72
    %74 = vrot.lane.b32.xlu0 %v63, 17
    %v75 = vpop.permute.xlu0 %74
    %76 = vrot.lane.b32.xlu0 %v67, 17
    %v77 = vpop.permute.xlu0 %76
    %v78 = vlaneseq
    %v79 = vand.u32 %v78, 127
    %vm80 = vcmp.lt.s32.totalorder %v79, 17
    %v81 = vsel %vm80, %v75, %v77
    %v82 = vsel %vm80, %v73, %v75
    %v83 = vsel %vm80, %v71, %v73
    %v84 = vsel %vm80, %v77, %v71
    %v85 = vlaneseq
    %v86 = vshrl.u32 %v85, 7
    %v87 = vsub.s32 0, %v86
    %v88 = vrot.slane %v54, %v87
    %v89 = vlaneseq
    %v90 = vshrl.u32 %v89, 7
    %v91 = vsub.s32 0, %v90
    %v92 = vrot.slane %v55, %v91
    %v93 = vlaneseq
    %v94 = vshrl.u32 %v93, 7
    %v95 = vsub.s32 0, %v94
    %v96 = vrot.slane %v56, %v95
    %v97 = vlaneseq
    %v98 = vshrl.u32 %v97, 7
    %v99 = vsub.s32 0, %v98
    %v100 = vrot.slane %v57, %v99
    %v101 = vmul.f32 %v84, %v88
    %v102 = vmul.f32 %v83, %v92
    %v103 = vmul.f32 %v82, %v96
    %v104 = vmul.f32 %v81, %v100
    %105 = vrot.lane.b32.xlu0 %v62, 16
    %v106 = vpop.permute.xlu0 %105
    %107 = vrot.lane.b32.xlu0 %v66, 16
    %v108 = vpop.permute.xlu0 %107
    %109 = vrot.lane.b32.xlu0 %v63, 16
    %v110 = vpop.permute.xlu0 %109
    %111 = vrot.lane.b32.xlu0 %v67, 16
    %v112 = vpop.permute.xlu0 %111
    %vm113 = vcmp.lt.s32.totalorder %v79, 16
    %v114 = vsel %vm113, %v110, %v112
    %v115 = vsel %vm113, %v108, %v110
    %v116 = vsel %vm113, %v106, %v108
    %v117 = vsel %vm113, %v112, %v106
    %v118 = vlaneseq
    %v119 = vshrl.u32 %v118, 7
    %v120 = vsub.s32 1, %v119
    %v121 = vrot.slane %v54, %v120
    %v122 = vlaneseq
    %v123 = vshrl.u32 %v122, 7
    %v124 = vsub.s32 1, %v123
    %v125 = vrot.slane %v55, %v124
    %v126 = vlaneseq
    %v127 = vshrl.u32 %v126, 7
    %v128 = vsub.s32 1, %v127
    %v129 = vrot.slane %v56, %v128
    %v130 = vlaneseq
    %v131 = vshrl.u32 %v130, 7
    %v132 = vsub.s32 1, %v131
    %v133 = vrot.slane %v57, %v132
    %v134 = vmul.f32 %v117, %v121
    %v135 = vmul.f32 %v116, %v125
    %v136 = vmul.f32 %v115, %v129
    %v137 = vmul.f32 %v114, %v133
    %138 = vrot.lane.b32.xlu0 %v62, 15
    %v139 = vpop.permute.xlu0 %138
    %140 = vrot.lane.b32.xlu0 %v66, 15
    %v141 = vpop.permute.xlu0 %140
    %142 = vrot.lane.b32.xlu0 %v63, 15
    %v143 = vpop.permute.xlu0 %142
    %144 = vrot.lane.b32.xlu0 %v67, 15
    %v145 = vpop.permute.xlu0 %144
    %vm146 = vcmp.lt.s32.totalorder %v79, 15
    %v147 = vsel %vm146, %v143, %v145
    %v148 = vsel %vm146, %v141, %v143
    %v149 = vsel %vm146, %v139, %v141
    %v150 = vsel %vm146, %v145, %v139
    %v151 = vlaneseq
    %v152 = vshrl.u32 %v151, 7
    %v153 = vsub.s32 2, %v152
    %v154 = vrot.slane %v54, %v153
    %v155 = vlaneseq
    %v156 = vshrl.u32 %v155, 7
    %v157 = vsub.s32 2, %v156
    %v158 = vrot.slane %v55, %v157
    %v159 = vlaneseq
    %v160 = vshrl.u32 %v159, 7
    %v161 = vsub.s32 2, %v160
    %v162 = vrot.slane %v56, %v161
    %v163 = vlaneseq
    %v164 = vshrl.u32 %v163, 7
    %v165 = vsub.s32 2, %v164
    %v166 = vrot.slane %v57, %v165
    %v167 = vmul.f32 %v150, %v154
    %v168 = vmul.f32 %v149, %v158
    %v169 = vmul.f32 %v148, %v162
    %v170 = vmul.f32 %v147, %v166
    %171 = vrot.lane.b32.xlu0 %v62, 1
    %v172 = vpop.permute.xlu0 %171
    %173 = vrot.lane.b32.xlu0 %v66, 1
    %v174 = vpop.permute.xlu0 %173
    %175 = vrot.lane.b32.xlu0 %v63, 1
    %v176 = vpop.permute.xlu0 %175
    %177 = vrot.lane.b32.xlu0 %v67, 1
    %v178 = vpop.permute.xlu0 %177
    %vm179 = vcmp.lt.s32.totalorder %v79, 1
    %v180 = vsel %vm179, %v176, %v178
    %v181 = vsel %vm179, %v174, %v176
    %v182 = vsel %vm179, %v172, %v174
    %v183 = vsel %vm179, %v178, %v172
    %v184 = vlaneseq
    %v185 = vshrl.u32 %v184, 7
    %v186 = vsub.s32 3, %v185
    %v187 = vrot.slane %v54, %v186
    %v188 = vlaneseq
    %v189 = vshrl.u32 %v188, 7
    %v190 = vsub.s32 3, %v189
    %v191 = vrot.slane %v55, %v190
    %v192 = vlaneseq
    %v193 = vshrl.u32 %v192, 7
    %v194 = vsub.s32 3, %v193
    %v195 = vrot.slane %v56, %v194
    %v196 = vlaneseq
    %v197 = vshrl.u32 %v196, 7
    %v198 = vsub.s32 3, %v197
    %v199 = vrot.slane %v57, %v198
    %v200 = vmul.f32 %v183, %v187
    %v201 = vmul.f32 %v182, %v191
    %v202 = vmul.f32 %v181, %v195
    %v203 = vmul.f32 %v180, %v199
    %v204 = vlaneseq
    %v205 = vshrl.u32 %v204, 7
    %v206 = vsub.s32 4, %v205
    %v207 = vrot.slane %v54, %v206
    %v208 = vlaneseq
    %v209 = vshrl.u32 %v208, 7
    %v210 = vsub.s32 4, %v209
    %v211 = vrot.slane %v55, %v210
    %v212 = vlaneseq
    %v213 = vshrl.u32 %v212, 7
    %v214 = vsub.s32 4, %v213
    %v215 = vrot.slane %v56, %v214
    %v216 = vlaneseq
    %v217 = vshrl.u32 %v216, 7
    %v218 = vsub.s32 4, %v217
    %v219 = vrot.slane %v57, %v218
    %v224 = vcombine.low %v207, %v211
    %v225 = vcombine.low %v215, %v219
    %v228 = vmul.f32 %v62, %v224
    %v229 = vmul.f32 %v63, %v225
    %230 = vrot.lane.b32.xlu0 %v62, 127
    %v231 = vpop.permute.xlu0 %230
    %232 = vrot.lane.b32.xlu0 %v66, 127
    %v233 = vpop.permute.xlu0 %232
    %234 = vrot.lane.b32.xlu0 %v63, 127
    %v235 = vpop.permute.xlu0 %234
    %236 = vrot.lane.b32.xlu0 %v67, 127
    %v237 = vpop.permute.xlu0 %236
    %vm238 = vcmp.lt.s32.totalorder %v79, 127
    %v239 = vsel %vm238, %v235, %v237
    %v240 = vsel %vm238, %v233, %v235
    %v241 = vsel %vm238, %v231, %v233
    %v242 = vsel %vm238, %v237, %v231
    %v243 = vlaneseq
    %v244 = vshrl.u32 %v243, 7
    %v245 = vsub.s32 5, %v244
    %v246 = vrot.slane %v54, %v245
    %v247 = vlaneseq
    %v248 = vshrl.u32 %v247, 7
    %v249 = vsub.s32 5, %v248
    %v250 = vrot.slane %v55, %v249
    %v251 = vlaneseq
    %v252 = vshrl.u32 %v251, 7
    %v253 = vsub.s32 5, %v252
    %v254 = vrot.slane %v56, %v253
    %v255 = vlaneseq
    %v256 = vshrl.u32 %v255, 7
    %v257 = vsub.s32 5, %v256
    %v258 = vrot.slane %v57, %v257
    %v259 = vmul.f32 %v241, %v246
    %v260 = vmul.f32 %v240, %v250
    %v261 = vmul.f32 %v239, %v254
    %v262 = vmul.f32 %v242, %v258
    %263 = vrot.lane.b32.xlu0 %v62, 113
    %v264 = vpop.permute.xlu0 %263
    %265 = vrot.lane.b32.xlu0 %v66, 113
    %v266 = vpop.permute.xlu0 %265
    %267 = vrot.lane.b32.xlu0 %v63, 113
    %v268 = vpop.permute.xlu0 %267
    %269 = vrot.lane.b32.xlu0 %v67, 113
    %v270 = vpop.permute.xlu0 %269
    %vm271 = vcmp.lt.s32.totalorder %v79, 113
    %v272 = vsel %vm271, %v268, %v270
    %v273 = vsel %vm271, %v266, %v268
    %v274 = vsel %vm271, %v264, %v266
    %v275 = vsel %vm271, %v270, %v264
    %v276 = vlaneseq
    %v277 = vshrl.u32 %v276, 7
    %v278 = vsub.s32 6, %v277
    %v279 = vrot.slane %v54, %v278
    %v280 = vlaneseq
    %v281 = vshrl.u32 %v280, 7
    %v282 = vsub.s32 6, %v281
    %v283 = vrot.slane %v55, %v282
    %v284 = vlaneseq
    %v285 = vshrl.u32 %v284, 7
    %v286 = vsub.s32 6, %v285
    %v287 = vrot.slane %v56, %v286
    %v288 = vlaneseq
    %v289 = vshrl.u32 %v288, 7
    %v290 = vsub.s32 6, %v289
    %v291 = vrot.slane %v57, %v290
    %v292 = vmul.f32 %v274, %v279
    %v293 = vmul.f32 %v273, %v283
    %v294 = vmul.f32 %v272, %v287
    %v295 = vmul.f32 %v275, %v291
    %296 = vrot.lane.b32.xlu0 %v62, 112
    %v297 = vpop.permute.xlu0 %296
    %298 = vrot.lane.b32.xlu0 %v66, 112
    %v299 = vpop.permute.xlu0 %298
    %300 = vrot.lane.b32.xlu0 %v63, 112
    %v301 = vpop.permute.xlu0 %300
    %302 = vrot.lane.b32.xlu0 %v67, 112
    %v303 = vpop.permute.xlu0 %302
    %vm304 = vcmp.lt.s32.totalorder %v79, 112
    %v305 = vsel %vm304, %v301, %v303
    %v306 = vsel %vm304, %v299, %v301
    %v307 = vsel %vm304, %v297, %v299
    %v308 = vsel %vm304, %v303, %v297
    %v309 = vlaneseq
    %v310 = vshrl.u32 %v309, 7
    %v311 = vsub.s32 7, %v310
    %v312 = vrot.slane %v54, %v311
    %v313 = vlaneseq
    %v314 = vshrl.u32 %v313, 7
    %v315 = vsub.s32 7, %v314
    %v316 = vrot.slane %v55, %v315
    %v317 = vlaneseq
    %v318 = vshrl.u32 %v317, 7
    %v319 = vsub.s32 7, %v318
    %v320 = vrot.slane %v56, %v319
    %v321 = vlaneseq
    %v322 = vshrl.u32 %v321, 7
    %v323 = vsub.s32 7, %v322
    %v324 = vrot.slane %v57, %v323
    %v325 = vmul.f32 %v307, %v312
    %v326 = vmul.f32 %v306, %v316
    %v327 = vmul.f32 %v305, %v320
    %v328 = vmul.f32 %v308, %v324
    %329 = vrot.lane.b32.xlu0 %v62, 111
    %v330 = vpop.permute.xlu0 %329
    %331 = vrot.lane.b32.xlu0 %v66, 111
    %v332 = vpop.permute.xlu0 %331
    %333 = vrot.lane.b32.xlu0 %v63, 111
    %v334 = vpop.permute.xlu0 %333
    %335 = vrot.lane.b32.xlu0 %v67, 111
    %v336 = vpop.permute.xlu0 %335
    %vm337 = vcmp.lt.s32.totalorder %v79, 111
    %v338 = vsel %vm337, %v334, %v336
    %v339 = vsel %vm337, %v332, %v334
    %v340 = vsel %vm337, %v330, %v332
    %v341 = vsel %vm337, %v336, %v330
    %v342 = vlaneseq
    %v343 = vshrl.u32 %v342, 7
    %v344 = vsub.s32 0, %v343
    %v345 = vrot.slane %v58, %v344
    %v346 = vlaneseq
    %v347 = vshrl.u32 %v346, 7
    %v348 = vsub.s32 0, %v347
    %v349 = vrot.slane %v59, %v348
    %v350 = vlaneseq
    %v351 = vshrl.u32 %v350, 7
    %v352 = vsub.s32 0, %v351
    %v353 = vrot.slane %v60, %v352
    %v354 = vlaneseq
    %v355 = vshrl.u32 %v354, 7
    %v356 = vsub.s32 0, %v355
    %v357 = vrot.slane %v61, %v356
    %v358 = vmul.f32 %v340, %v345
    %v359 = vmul.f32 %v339, %v349
    %v360 = vmul.f32 %v338, %v353
    %v361 = vmul.f32 %v341, %v357
    %v366 = vrot.slane %v134, 4
    %v367 = vrot.slane %v135, 4
    %v368 = vrot.slane %v136, 4
    %v369 = vrot.slane %v137, 4
    %v378 = vrot.slane %v200, 4
    %v379 = vrot.slane %v201, 4
    %v380 = vrot.slane %v202, 4
    %v381 = vrot.slane %v203, 4
    %v388 = vcombine.high %v228, %v228
    %v389 = vcombine.high %v229, %v229
    %v396 = vrot.slane %v259, 4
    %v397 = vrot.slane %v260, 4
    %v398 = vrot.slane %v261, 4
    %v399 = vrot.slane %v262, 4
    %v408 = vrot.slane %v325, 4
    %v409 = vrot.slane %v326, 4
    %v410 = vrot.slane %v327, 4
    %v411 = vrot.slane %v328, 4
    %vm416 = vcmask 1043456
    %v417 = vsel %vm416, %v101, %v366
    %v418 = vsel %vm416, %v102, %v367
    %v419 = vsel %vm416, %v103, %v368
    %v420 = vsel %vm416, %v104, %v369
    %v421 = vsel %vm416, %v167, %v378
    %v422 = vsel %vm416, %v168, %v379
    %v423 = vsel %vm416, %v169, %v380
    %v424 = vsel %vm416, %v170, %v381
    %v425 = vsel %vm416, %v228, %v396
    %v426 = vsel %vm416, %v388, %v397
    %v427 = vsel %vm416, %v229, %v398
    %v428 = vsel %vm416, %v389, %v399
    %v429 = vsel %vm416, %v292, %v408
    %v430 = vsel %vm416, %v293, %v409
    %v431 = vsel %vm416, %v294, %v410
    %v432 = vsel %vm416, %v295, %v411
    %v433 = vld [vmem:[%s2] sm:$0xff]
    %v434 = vld [vmem:[%s3] sm:$0xff]
    %436 = vset.pattern.permute.xlu0 0
    %437 = vperm.xlu0 %436, %v434
    %v438 = vpop.permute.xlu0 %437
    %vm440 = vcmask 293888
    %v442 = vsel %vm440, %v433, 0
    %v445 = vsel %vm416, %v358, 0
    %v448 = vsel %vm416, %v359, 0
    %v451 = vsel %vm416, %v360, 0
    %v454 = vsel %vm416, %v361, 0
    %456 = vmatprep.subr.mxu0 %v418
    %457 = vmatpush1.msra.mxu0 %v417
    %458 = vmatprep.subr.mxu0 %v422
    %459 = vmatpush1.msra.mxu0 %v421
    %460 = vmatprep.subr.mxu0 %v426
    %461 = vmatpush1.msra.mxu0 %v425
    %462 = vmatprep.subr.mxu0 %v430
    %463 = vmatpush1.msra.mxu0 %v429
    %464 = vmatprep.subr.mxu0 %v448
    %465 = vmatpush1.msra.mxu0 %v445
    %466 = vmatprep.subr.mxu0 0.0
    %467 = vmatpush1.msra.mxu0 0.0
    %468 = vmatprep.subr.mxu0 0.0
    %469 = vmatpush1.msra.mxu0 0.0
    %470 = vmatprep.subr.mxu0 0.0
    %471 = vmatpush1.msra.mxu0 0.0
    %472 = vmatprep.subr.mxu0 0.0
    %473 = vmatpush1.msra.mxu0 0.0
    %474 = vmatprep.subr.mxu0 0.0
    %475 = vmatpush1.msra.mxu0 0.0
    %476 = vmatprep.subr.mxu0 0.0
    %477 = vmatpush1.msra.mxu0 0.0
    %478 = vmatprep.subr.mxu0 0.0
    %479 = vmatpush1.msra.mxu0 0.0
    %480 = vmatprep.subr.mxu0 0.0
    %481 = vmatpush1.msra.mxu0 0.0
    %482 = vmatprep.subr.mxu0 0.0
    %483 = vmatpush1.msra.mxu0 0.0
    %484 = vmatprep.subr.mxu0 0.0
    %485 = vmatpush1.msra.mxu0 0.0
    %486 = vmatprep.subr.mxu0 0.0
    %487 = vmatpush1.msra.mxu0 0.0
    %488 = vmatprep.subr.mxu0 0.0
    %489 = vmatpush1.msra.mxu0 0.0
    %490 = vmatprep.subr.mxu0 0.0
    %491 = vmatpush1.msra.mxu0 0.0
    %492 = vmatprep.subr.mxu0 0.0
    %493 = vmatpush1.msra.mxu0 0.0
    %494 = vmatprep.subr.mxu0 0.0
    %495 = vmatpush1.msra.mxu0 0.0
    %496 = vmatprep.subr.mxu0 0.0
    %497 = vmatpush1.msra.mxu0 0.0
    %498 = vmatprep.subr.mxu0 0.0
    %499 = vmatpush1.msra.mxu0 0.0
    %500 = vmatprep.subr.mxu0 0.0
    %501 = vmatpush1.msra.mxu0 0.0
    %502 = vmatprep.subr.mxu0 0.0
    %503 = vmatpush1.msra.mxu0 0.0
    %504 = vmatprep.subr.mxu0 0.0
    %505 = vmatpush1.msra.mxu0 0.0
    %506 = vmatprep.subr.mxu0 0.0
    %507 = vmatpush1.msra.mxu0 0.0
    %508 = vmatprep.subr.mxu0 0.0
    %509 = vmatpush1.msra.mxu0 0.0
    %510 = vmatprep.subr.mxu0 0.0
    %511 = vmatpush1.msra.mxu0 0.0
    %512 = vmatprep.subr.mxu0 0.0
    %513 = vmatpush1.msra.mxu0 0.0
    %514 = vmatprep.subr.mxu0 0.0
    %515 = vmatpush1.msra.mxu0 0.0
    %516 = vmatprep.subr.mxu0 0.0
    %517 = vmatpush1.msra.mxu0 0.0
    %518 = vmatprep.subr.mxu0 0.0
    %519 = vmatpush1.msra.mxu0 0.0
    %520 = vmatprep.mubr.f32.mxu0 0.0
    %521 = vmatmul.mubr.f32.gmra.mrb[0].mxu0 %v442
    %v522 = vpop.f32.mrb[0].mxu0
    %v523 = vadd.f32 %v438, %v522
    %v524 = vpop.f32.mrb[0].mxu0
    %v525 = vadd.f32 %v438, %v524
    %526 = vdwg.mxu0
    %527 = vmatprep.subr.mxu0 %v420
    %528 = vmatpush1.msra.mxu0 %v419
    %529 = vmatprep.subr.mxu0 %v424
    %530 = vmatpush1.msra.mxu0 %v423
    %531 = vmatprep.subr.mxu0 %v428
    %532 = vmatpush1.msra.mxu0 %v427
    %533 = vmatprep.subr.mxu0 %v432
    %534 = vmatpush1.msra.mxu0 %v431
    %535 = vmatprep.subr.mxu0 %v454
    %536 = vmatpush1.msra.mxu0 %v451
    %537 = vmatprep.subr.mxu0 0.0
    %538 = vmatpush1.msra.mxu0 0.0
    %539 = vmatprep.subr.mxu0 0.0
    %540 = vmatpush1.msra.mxu0 0.0
    %541 = vmatprep.subr.mxu0 0.0
    %542 = vmatpush1.msra.mxu0 0.0
    %543 = vmatprep.subr.mxu0 0.0
    %544 = vmatpush1.msra.mxu0 0.0
    %545 = vmatprep.subr.mxu0 0.0
    %546 = vmatpush1.msra.mxu0 0.0
    %547 = vmatprep.subr.mxu0 0.0
    %548 = vmatpush1.msra.mxu0 0.0
    %549 = vmatprep.subr.mxu0 0.0
    %550 = vmatpush1.msra.mxu0 0.0
    %551 = vmatprep.subr.mxu0 0.0
    %552 = vmatpush1.msra.mxu0 0.0
    %553 = vmatprep.subr.mxu0 0.0
    %554 = vmatpush1.msra.mxu0 0.0
    %555 = vmatprep.subr.mxu0 0.0
    %556 = vmatpush1.msra.mxu0 0.0
    %557 = vmatprep.subr.mxu0 0.0
    %558 = vmatpush1.msra.mxu0 0.0
    %559 = vmatprep.subr.mxu0 0.0
    %560 = vmatpush1.msra.mxu0 0.0
    %561 = vmatprep.subr.mxu0 0.0
    %562 = vmatpush1.msra.mxu0 0.0
    %563 = vmatprep.subr.mxu0 0.0
    %564 = vmatpush1.msra.mxu0 0.0
    %565 = vmatprep.subr.mxu0 0.0
    %566 = vmatpush1.msra.mxu0 0.0
    %567 = vmatprep.subr.mxu0 0.0
    %568 = vmatpush1.msra.mxu0 0.0
    %569 = vmatprep.subr.mxu0 0.0
    %570 = vmatpush1.msra.mxu0 0.0
    %571 = vmatprep.subr.mxu0 0.0
    %572 = vmatpush1.msra.mxu0 0.0
    %573 = vmatprep.subr.mxu0 0.0
    %574 = vmatpush1.msra.mxu0 0.0
    %575 = vmatprep.subr.mxu0 0.0
    %576 = vmatpush1.msra.mxu0 0.0
    %577 = vmatprep.subr.mxu0 0.0
    %578 = vmatpush1.msra.mxu0 0.0
    %579 = vmatprep.subr.mxu0 0.0
    %580 = vmatpush1.msra.mxu0 0.0
    %581 = vmatprep.subr.mxu0 0.0
    %582 = vmatpush1.msra.mxu0 0.0
    %583 = vmatprep.subr.mxu0 0.0
    %584 = vmatpush1.msra.mxu0 0.0
    %585 = vmatprep.subr.mxu0 0.0
    %586 = vmatpush1.msra.mxu0 0.0
    %587 = vmatprep.subr.mxu0 0.0
    %588 = vmatpush1.msra.mxu0 0.0
    %589 = vmatprep.subr.mxu0 0.0
    %590 = vmatpush1.msra.mxu0 0.0
    %591 = vmatprep.mubr.f32.mxu0 0.0
    %592 = vmatmul.mubr.f32.gmra.mrb[0].mxu0 %v442
    %v593 = vpop.f32.mrb[0].mxu0
    %v594 = vadd.f32 %v438, %v593
    %v595 = vpop.f32.mrb[0].mxu0
    %v596 = vadd.f32 %v438, %v595
    %597 = vdwg.mxu0
    %v598 = vadd.f32 %v523, %v525
    %v599 = vadd.f32 %v598, %v594
    %v600 = vadd.f32 %v599, %v596
    %601 = vadd.xlane.f32.xlu0 %v600
    %v602 = vpop.xlane.xlu0 %601
    %v603 = vrcp.pop 512.0
    %v604 = vmul.f32 %v602, %v603
    %v605 = vmul.f32 %v523, %v523
    %v606 = vmul.f32 %v525, %v525
    %v607 = vmul.f32 %v594, %v594
    %v608 = vmul.f32 %v596, %v596
    %v609 = vadd.f32 %v605, %v606
    %v610 = vadd.f32 %v609, %v607
    %v611 = vadd.f32 %v610, %v608
    %612 = vadd.xlane.f32.xlu0 %v611
    %v613 = vpop.xlane.xlu0 %612
    %v614 = vmul.f32 %v613, %v603
    %v615 = vmul.f32 %v604, %v604
    %v616 = vsub.f32 %v614, %v615
    %v617 = vmax.f32 %v616, 0.0
    %v618 = vld [vmem:[%s4] sm:$0xff]
    %v619 = vadd.f32 %v617, 1e-05
    %v620 = vrsqrt.pop %v619
    %v621 = vmul.f32 %v618, %v620
    %623 = vset.pattern.permute.xlu0 0
    %624 = vperm.xlu0 %623, %v621
    %v625 = vpop.permute.xlu0 %624
    %v627 = vmul.f32 %v523, %v625
    %v628 = vmul.f32 %v525, %v625
    %v629 = vmul.f32 %v594, %v625
    %v630 = vmul.f32 %v596, %v625
    %v631 = vld [vmem:[%s5] sm:$0xff]
    %v632 = vmul.f32 %v604, %v621
    %v633 = vsub.f32 %v631, %v632
    %635 = vset.pattern.permute.xlu0 0
    %636 = vperm.xlu0 %635, %v633
    %v637 = vpop.permute.xlu0 %636
    %v639 = vadd.f32 %v627, %v637
    %v640 = vadd.f32 %v628, %v637
    %v641 = vadd.f32 %v629, %v637
    %v642 = vadd.f32 %v630, %v637
    %v643 = vmax.f32 %v639, 0.0
    %v644 = vmax.f32 %v640, 0.0
    %v645 = vmax.f32 %v641, 0.0
    %v646 = vmax.f32 %v642, 0.0
    %647 = vrot.lane.b32.xlu0 %v643, 17
    %v648 = vpop.permute.xlu0 %647
    %649 = vrot.lane.b32.xlu0 %v644, 17
    %v650 = vpop.permute.xlu0 %649
    %651 = vrot.lane.b32.xlu0 %v645, 17
    %v652 = vpop.permute.xlu0 %651
    %653 = vrot.lane.b32.xlu0 %v646, 17
    %v654 = vpop.permute.xlu0 %653
    %v655 = vsel %vm80, %v652, %v654
    %v656 = vsel %vm80, %v650, %v652
    %v657 = vsel %vm80, %v648, %v650
    %v658 = vsel %vm80, %v654, %v648
    %v659 = vmul.f32 %v658, %v88
    %v660 = vmul.f32 %v657, %v92
    %v661 = vmul.f32 %v656, %v96
    %v662 = vmul.f32 %v655, %v100
    %663 = vrot.lane.b32.xlu0 %v643, 16
    %v664 = vpop.permute.xlu0 %663
    %665 = vrot.lane.b32.xlu0 %v644, 16
    %v666 = vpop.permute.xlu0 %665
    %667 = vrot.lane.b32.xlu0 %v645, 16
    %v668 = vpop.permute.xlu0 %667
    %669 = vrot.lane.b32.xlu0 %v646, 16
    %v670 = vpop.permute.xlu0 %669
    %v671 = vsel %vm113, %v668, %v670
    %v672 = vsel %vm113, %v666, %v668
    %v673 = vsel %vm113, %v664, %v666
    %v674 = vsel %vm113, %v670, %v664
    %v675 = vmul.f32 %v674, %v121
    %v676 = vmul.f32 %v673, %v125
    %v677 = vmul.f32 %v672, %v129
    %v678 = vmul.f32 %v671, %v133
    %679 = vrot.lane.b32.xlu0 %v643, 15
    %v680 = vpop.permute.xlu0 %679
    %681 = vrot.lane.b32.xlu0 %v644, 15
    %v682 = vpop.permute.xlu0 %681
    %683 = vrot.lane.b32.xlu0 %v645, 15
    %v684 = vpop.permute.xlu0 %683
    %685 = vrot.lane.b32.xlu0 %v646, 15
    %v686 = vpop.permute.xlu0 %685
    %v687 = vsel %vm146, %v684, %v686
    %v688 = vsel %vm146, %v682, %v684
    %v689 = vsel %vm146, %v680, %v682
    %v690 = vsel %vm146, %v686, %v680
    %v691 = vmul.f32 %v690, %v154
    %v692 = vmul.f32 %v689, %v158
    %v693 = vmul.f32 %v688, %v162
    %v694 = vmul.f32 %v687, %v166
    %695 = vrot.lane.b32.xlu0 %v643, 1
    %v696 = vpop.permute.xlu0 %695
    %697 = vrot.lane.b32.xlu0 %v644, 1
    %v698 = vpop.permute.xlu0 %697
    %699 = vrot.lane.b32.xlu0 %v645, 1
    %v700 = vpop.permute.xlu0 %699
    %701 = vrot.lane.b32.xlu0 %v646, 1
    %v702 = vpop.permute.xlu0 %701
    %v703 = vsel %vm179, %v700, %v702
    %v704 = vsel %vm179, %v698, %v700
    %v705 = vsel %vm179, %v696, %v698
    %v706 = vsel %vm179, %v702, %v696
    %v707 = vmul.f32 %v706, %v187
    %v708 = vmul.f32 %v705, %v191
    %v709 = vmul.f32 %v704, %v195
    %v710 = vmul.f32 %v703, %v199
    %v711 = vmul.f32 %v643, %v207
    %v712 = vmul.f32 %v644, %v211
    %v713 = vmul.f32 %v645, %v215
    %v714 = vmul.f32 %v646, %v219
    %715 = vrot.lane.b32.xlu0 %v643, 127
    %v716 = vpop.permute.xlu0 %715
    %717 = vrot.lane.b32.xlu0 %v644, 127
    %v718 = vpop.permute.xlu0 %717
    %719 = vrot.lane.b32.xlu0 %v645, 127
    %v720 = vpop.permute.xlu0 %719
    %721 = vrot.lane.b32.xlu0 %v646, 127
    %v722 = vpop.permute.xlu0 %721
    %v723 = vsel %vm238, %v720, %v722
    %v724 = vsel %vm238, %v718, %v720
    %v725 = vsel %vm238, %v716, %v718
    %v726 = vsel %vm238, %v722, %v716
    %v727 = vmul.f32 %v725, %v246
    %v728 = vmul.f32 %v724, %v250
    %v729 = vmul.f32 %v723, %v254
    %v730 = vmul.f32 %v726, %v258
    %731 = vrot.lane.b32.xlu0 %v643, 113
    %v732 = vpop.permute.xlu0 %731
    %733 = vrot.lane.b32.xlu0 %v644, 113
    %v734 = vpop.permute.xlu0 %733
    %735 = vrot.lane.b32.xlu0 %v645, 113
    %v736 = vpop.permute.xlu0 %735
    %737 = vrot.lane.b32.xlu0 %v646, 113
    %v738 = vpop.permute.xlu0 %737
    %v739 = vsel %vm271, %v736, %v738
    %v740 = vsel %vm271, %v734, %v736
    %v741 = vsel %vm271, %v732, %v734
    %v742 = vsel %vm271, %v738, %v732
    %v743 = vmul.f32 %v741, %v279
    %v744 = vmul.f32 %v740, %v283
    %v745 = vmul.f32 %v739, %v287
    %v746 = vmul.f32 %v742, %v291
    %747 = vrot.lane.b32.xlu0 %v643, 112
    %v748 = vpop.permute.xlu0 %747
    %749 = vrot.lane.b32.xlu0 %v644, 112
    %v750 = vpop.permute.xlu0 %749
    %751 = vrot.lane.b32.xlu0 %v645, 112
    %v752 = vpop.permute.xlu0 %751
    %753 = vrot.lane.b32.xlu0 %v646, 112
    %v754 = vpop.permute.xlu0 %753
    %v755 = vsel %vm304, %v752, %v754
    %v756 = vsel %vm304, %v750, %v752
    %v757 = vsel %vm304, %v748, %v750
    %v758 = vsel %vm304, %v754, %v748
    %v759 = vmul.f32 %v757, %v312
    %v760 = vmul.f32 %v756, %v316
    %v761 = vmul.f32 %v755, %v320
    %v762 = vmul.f32 %v758, %v324
    %763 = vrot.lane.b32.xlu0 %v643, 111
    %v764 = vpop.permute.xlu0 %763
    %765 = vrot.lane.b32.xlu0 %v644, 111
    %v766 = vpop.permute.xlu0 %765
    %767 = vrot.lane.b32.xlu0 %v645, 111
    %v768 = vpop.permute.xlu0 %767
    %769 = vrot.lane.b32.xlu0 %v646, 111
    %v770 = vpop.permute.xlu0 %769
    %v771 = vsel %vm337, %v768, %v770
    %v772 = vsel %vm337, %v766, %v768
    %v773 = vsel %vm337, %v764, %v766
    %v774 = vsel %vm337, %v770, %v764
    %v775 = vmul.f32 %v773, %v345
    %v776 = vmul.f32 %v772, %v349
    %v777 = vmul.f32 %v771, %v353
    %v778 = vmul.f32 %v774, %v357
    %v779 = vld [vmem:[%s6] sm:$0xff]
    %v780 = vld [vmem:[%s7] sm:$0xff]
    %782 = vset.pattern.permute.xlu0 0
    %783 = vperm.xlu0 %782, %v780
    %v784 = vpop.permute.xlu0 %783
    %vm786 = vcmask 588800
    %v788 = vsel %vm786, %v779, 0
    %790 = vmatprep.subr.mxu0 %v660
    %791 = vmatpush1.msra.mxu0 %v659
    %792 = vmatprep.subr.mxu0 %v676
    %793 = vmatpush1.msra.mxu0 %v675
    %794 = vmatprep.subr.mxu0 %v692
    %795 = vmatpush1.msra.mxu0 %v691
    %796 = vmatprep.subr.mxu0 %v708
    %797 = vmatpush1.msra.mxu0 %v707
    %798 = vmatprep.subr.mxu0 %v712
    %799 = vmatpush1.msra.mxu0 %v711
    %800 = vmatprep.subr.mxu0 %v728
    %801 = vmatpush1.msra.mxu0 %v727
    %802 = vmatprep.subr.mxu0 %v744
    %803 = vmatpush1.msra.mxu0 %v743
    %804 = vmatprep.subr.mxu0 %v760
    %805 = vmatpush1.msra.mxu0 %v759
    %806 = vmatprep.subr.mxu0 %v776
    %807 = vmatpush1.msra.mxu0 %v775
    %808 = vmatprep.subr.mxu0 0.0
    %809 = vmatpush1.msra.mxu0 0.0
    %810 = vmatprep.subr.mxu0 0.0
    %811 = vmatpush1.msra.mxu0 0.0
    %812 = vmatprep.subr.mxu0 0.0
    %813 = vmatpush1.msra.mxu0 0.0
    %814 = vmatprep.subr.mxu0 0.0
    %815 = vmatpush1.msra.mxu0 0.0
    %816 = vmatprep.subr.mxu0 0.0
    %817 = vmatpush1.msra.mxu0 0.0
    %818 = vmatprep.subr.mxu0 0.0
    %819 = vmatpush1.msra.mxu0 0.0
    %820 = vmatprep.subr.mxu0 0.0
    %821 = vmatpush1.msra.mxu0 0.0
    %822 = vmatprep.subr.mxu0 0.0
    %823 = vmatpush1.msra.mxu0 0.0
    %824 = vmatprep.subr.mxu0 0.0
    %825 = vmatpush1.msra.mxu0 0.0
    %826 = vmatprep.subr.mxu0 0.0
    %827 = vmatpush1.msra.mxu0 0.0
    %828 = vmatprep.subr.mxu0 0.0
    %829 = vmatpush1.msra.mxu0 0.0
    %830 = vmatprep.subr.mxu0 0.0
    %831 = vmatpush1.msra.mxu0 0.0
    %832 = vmatprep.subr.mxu0 0.0
    %833 = vmatpush1.msra.mxu0 0.0
    %834 = vmatprep.subr.mxu0 0.0
    %835 = vmatpush1.msra.mxu0 0.0
    %836 = vmatprep.subr.mxu0 0.0
    %837 = vmatpush1.msra.mxu0 0.0
    %838 = vmatprep.subr.mxu0 0.0
    %839 = vmatpush1.msra.mxu0 0.0
    %840 = vmatprep.subr.mxu0 0.0
    %841 = vmatpush1.msra.mxu0 0.0
    %842 = vmatprep.subr.mxu0 0.0
    %843 = vmatpush1.msra.mxu0 0.0
    %844 = vmatprep.subr.mxu0 0.0
    %845 = vmatpush1.msra.mxu0 0.0
    %846 = vmatprep.subr.mxu0 0.0
    %847 = vmatpush1.msra.mxu0 0.0
    %848 = vmatprep.subr.mxu0 0.0
    %849 = vmatpush1.msra.mxu0 0.0
    %850 = vmatprep.subr.mxu0 0.0
    %851 = vmatpush1.msra.mxu0 0.0
    %852 = vmatprep.subr.mxu0 0.0
    %853 = vmatpush1.msra.mxu0 0.0
    %854 = vmatprep.mubr.f32.mxu0 0.0
    %855 = vmatmul.mubr.f32.gmra.mrb[0].mxu0 %v788
    %v856 = vpop.f32.mrb[0].mxu0
    %v857 = vadd.f32 %v784, %v856
    %v858 = vpop.f32.mrb[0].mxu0
    %v859 = vadd.f32 %v784, %v858
    %860 = vdwg.mxu0
    %861 = vmatprep.subr.mxu0 %v662
    %862 = vmatpush1.msra.mxu0 %v661
    %863 = vmatprep.subr.mxu0 %v678
    %864 = vmatpush1.msra.mxu0 %v677
    %865 = vmatprep.subr.mxu0 %v694
    %866 = vmatpush1.msra.mxu0 %v693
    %867 = vmatprep.subr.mxu0 %v710
    %868 = vmatpush1.msra.mxu0 %v709
    %869 = vmatprep.subr.mxu0 %v714
    %870 = vmatpush1.msra.mxu0 %v713
    %871 = vmatprep.subr.mxu0 %v730
    %872 = vmatpush1.msra.mxu0 %v729
    %873 = vmatprep.subr.mxu0 %v746
    %874 = vmatpush1.msra.mxu0 %v745
    %875 = vmatprep.subr.mxu0 %v762
    %876 = vmatpush1.msra.mxu0 %v761
    %877 = vmatprep.subr.mxu0 %v778
    %878 = vmatpush1.msra.mxu0 %v777
    %879 = vmatprep.subr.mxu0 0.0
    %880 = vmatpush1.msra.mxu0 0.0
    %881 = vmatprep.subr.mxu0 0.0
    %882 = vmatpush1.msra.mxu0 0.0
    %883 = vmatprep.subr.mxu0 0.0
    %884 = vmatpush1.msra.mxu0 0.0
    %885 = vmatprep.subr.mxu0 0.0
    %886 = vmatpush1.msra.mxu0 0.0
    %887 = vmatprep.subr.mxu0 0.0
    %888 = vmatpush1.msra.mxu0 0.0
    %889 = vmatprep.subr.mxu0 0.0
    %890 = vmatpush1.msra.mxu0 0.0
    %891 = vmatprep.subr.mxu0 0.0
    %892 = vmatpush1.msra.mxu0 0.0
    %893 = vmatprep.subr.mxu0 0.0
    %894 = vmatpush1.msra.mxu0 0.0
    %895 = vmatprep.subr.mxu0 0.0
    %896 = vmatpush1.msra.mxu0 0.0
    %897 = vmatprep.subr.mxu0 0.0
    %898 = vmatpush1.msra.mxu0 0.0
    %899 = vmatprep.subr.mxu0 0.0
    %900 = vmatpush1.msra.mxu0 0.0
    %901 = vmatprep.subr.mxu0 0.0
    %902 = vmatpush1.msra.mxu0 0.0
    %903 = vmatprep.subr.mxu0 0.0
    %904 = vmatpush1.msra.mxu0 0.0
    %905 = vmatprep.subr.mxu0 0.0
    %906 = vmatpush1.msra.mxu0 0.0
    %907 = vmatprep.subr.mxu0 0.0
    %908 = vmatpush1.msra.mxu0 0.0
    %909 = vmatprep.subr.mxu0 0.0
    %910 = vmatpush1.msra.mxu0 0.0
    %911 = vmatprep.subr.mxu0 0.0
    %912 = vmatpush1.msra.mxu0 0.0
    %913 = vmatprep.subr.mxu0 0.0
    %914 = vmatpush1.msra.mxu0 0.0
    %915 = vmatprep.subr.mxu0 0.0
    %916 = vmatpush1.msra.mxu0 0.0
    %917 = vmatprep.subr.mxu0 0.0
    %918 = vmatpush1.msra.mxu0 0.0
    %919 = vmatprep.subr.mxu0 0.0
    %920 = vmatpush1.msra.mxu0 0.0
    %921 = vmatprep.subr.mxu0 0.0
    %922 = vmatpush1.msra.mxu0 0.0
    %923 = vmatprep.subr.mxu0 0.0
    %924 = vmatpush1.msra.mxu0 0.0
    %925 = vmatprep.mubr.f32.mxu0 0.0
    %926 = vmatmul.mubr.f32.gmra.mrb[0].mxu0 %v788
    %v927 = vpop.f32.mrb[0].mxu0
    %v928 = vadd.f32 %v784, %v927
    %v929 = vpop.f32.mrb[0].mxu0
    %v930 = vadd.f32 %v784, %v929
    %931 = vdwg.mxu0
    %v932 = vadd.f32 %v857, %v859
    %v933 = vadd.f32 %v932, %v928
    %v934 = vadd.f32 %v933, %v930
    %935 = vadd.xlane.f32.xlu0 %v934
    %v936 = vpop.xlane.xlu0 %935
    %v937 = vmul.f32 %v936, %v603
    %v938 = vmul.f32 %v857, %v857
    %v939 = vmul.f32 %v859, %v859
    %v940 = vmul.f32 %v928, %v928
    %v941 = vmul.f32 %v930, %v930
    %v942 = vadd.f32 %v938, %v939
    %v943 = vadd.f32 %v942, %v940
    %v944 = vadd.f32 %v943, %v941
    %945 = vadd.xlane.f32.xlu0 %v944
    %v946 = vpop.xlane.xlu0 %945
    %v947 = vmul.f32 %v946, %v603
    %v948 = vmul.f32 %v937, %v937
    %v949 = vsub.f32 %v947, %v948
    %v950 = vmax.f32 %v949, 0.0
    %v951 = vld [vmem:[%s8] sm:$0xff]
    %v952 = vadd.f32 %v950, 1e-05
    %v953 = vrsqrt.pop %v952
    %v954 = vmul.f32 %v951, %v953
    %956 = vset.pattern.permute.xlu0 0
    %957 = vperm.xlu0 %956, %v954
    %v958 = vpop.permute.xlu0 %957
    %v960 = vmul.f32 %v857, %v958
    %v961 = vmul.f32 %v859, %v958
    %v962 = vmul.f32 %v928, %v958
    %v963 = vmul.f32 %v930, %v958
    %v964 = vld [vmem:[%s9] sm:$0xff]
    %v965 = vmul.f32 %v937, %v954
    %v966 = vsub.f32 %v964, %v965
    %968 = vset.pattern.permute.xlu0 0
    %969 = vperm.xlu0 %968, %v966
    %v970 = vpop.permute.xlu0 %969
    %v972 = vadd.f32 %v960, %v970
    %v973 = vadd.f32 %v961, %v970
    %v974 = vadd.f32 %v962, %v970
    %v975 = vadd.f32 %v963, %v970
    %v976 = vmax.f32 %v972, 0.0
    %v977 = vmax.f32 %v973, 0.0
    %v978 = vmax.f32 %v974, 0.0
    %v979 = vmax.f32 %v975, 0.0
    %980 = vrot.lane.b32.xlu0 %v976, 17
    %v981 = vpop.permute.xlu0 %980
    %982 = vrot.lane.b32.xlu0 %v977, 17
    %v983 = vpop.permute.xlu0 %982
    %984 = vrot.lane.b32.xlu0 %v978, 17
    %v985 = vpop.permute.xlu0 %984
    %986 = vrot.lane.b32.xlu0 %v979, 17
    %v987 = vpop.permute.xlu0 %986
    %v988 = vsel %vm80, %v985, %v987
    %v989 = vsel %vm80, %v983, %v985
    %v990 = vsel %vm80, %v981, %v983
    %v991 = vsel %vm80, %v987, %v981
    %v992 = vmul.f32 %v991, %v88
    %v993 = vmul.f32 %v990, %v92
    %v994 = vmul.f32 %v989, %v96
    %v995 = vmul.f32 %v988, %v100
    %996 = vrot.lane.b32.xlu0 %v976, 16
    %v997 = vpop.permute.xlu0 %996
    %998 = vrot.lane.b32.xlu0 %v977, 16
    %v999 = vpop.permute.xlu0 %998
    %1000 = vrot.lane.b32.xlu0 %v978, 16
    %v1001 = vpop.permute.xlu0 %1000
    %1002 = vrot.lane.b32.xlu0 %v979, 16
    %v1003 = vpop.permute.xlu0 %1002
    %v1004 = vsel %vm113, %v1001, %v1003
    %v1005 = vsel %vm113, %v999, %v1001
    %v1006 = vsel %vm113, %v997, %v999
    %v1007 = vsel %vm113, %v1003, %v997
    %v1008 = vmul.f32 %v1007, %v121
    %v1009 = vmul.f32 %v1006, %v125
    %v1010 = vmul.f32 %v1005, %v129
    %v1011 = vmul.f32 %v1004, %v133
    %1012 = vrot.lane.b32.xlu0 %v976, 15
    %v1013 = vpop.permute.xlu0 %1012
    %1014 = vrot.lane.b32.xlu0 %v977, 15
    %v1015 = vpop.permute.xlu0 %1014
    %1016 = vrot.lane.b32.xlu0 %v978, 15
    %v1017 = vpop.permute.xlu0 %1016
    %1018 = vrot.lane.b32.xlu0 %v979, 15
    %v1019 = vpop.permute.xlu0 %1018
    %v1020 = vsel %vm146, %v1017, %v1019
    %v1021 = vsel %vm146, %v1015, %v1017
    %v1022 = vsel %vm146, %v1013, %v1015
    %v1023 = vsel %vm146, %v1019, %v1013
    %v1024 = vmul.f32 %v1023, %v154
    %v1025 = vmul.f32 %v1022, %v158
    %v1026 = vmul.f32 %v1021, %v162
    %v1027 = vmul.f32 %v1020, %v166
    %1028 = vrot.lane.b32.xlu0 %v976, 1
    %v1029 = vpop.permute.xlu0 %1028
    %1030 = vrot.lane.b32.xlu0 %v977, 1
    %v1031 = vpop.permute.xlu0 %1030
    %1032 = vrot.lane.b32.xlu0 %v978, 1
    %v1033 = vpop.permute.xlu0 %1032
    %1034 = vrot.lane.b32.xlu0 %v979, 1
    %v1035 = vpop.permute.xlu0 %1034
    %v1036 = vsel %vm179, %v1033, %v1035
    %v1037 = vsel %vm179, %v1031, %v1033
    %v1038 = vsel %vm179, %v1029, %v1031
    %v1039 = vsel %vm179, %v1035, %v1029
    %v1040 = vmul.f32 %v1039, %v187
    %v1041 = vmul.f32 %v1038, %v191
    %v1042 = vmul.f32 %v1037, %v195
    %v1043 = vmul.f32 %v1036, %v199
    %v1044 = vmul.f32 %v976, %v207
    %v1045 = vmul.f32 %v977, %v211
    %v1046 = vmul.f32 %v978, %v215
    %v1047 = vmul.f32 %v979, %v219
    %1048 = vrot.lane.b32.xlu0 %v976, 127
    %v1049 = vpop.permute.xlu0 %1048
    %1050 = vrot.lane.b32.xlu0 %v977, 127
    %v1051 = vpop.permute.xlu0 %1050
    %1052 = vrot.lane.b32.xlu0 %v978, 127
    %v1053 = vpop.permute.xlu0 %1052
    %1054 = vrot.lane.b32.xlu0 %v979, 127
    %v1055 = vpop.permute.xlu0 %1054
    %v1056 = vsel %vm238, %v1053, %v1055
    %v1057 = vsel %vm238, %v1051, %v1053
    %v1058 = vsel %vm238, %v1049, %v1051
    %v1059 = vsel %vm238, %v1055, %v1049
    %v1060 = vmul.f32 %v1058, %v246
    %v1061 = vmul.f32 %v1057, %v250
    %v1062 = vmul.f32 %v1056, %v254
    %v1063 = vmul.f32 %v1059, %v258
    %1064 = vrot.lane.b32.xlu0 %v976, 113
    %v1065 = vpop.permute.xlu0 %1064
    %1066 = vrot.lane.b32.xlu0 %v977, 113
    %v1067 = vpop.permute.xlu0 %1066
    %1068 = vrot.lane.b32.xlu0 %v978, 113
    %v1069 = vpop.permute.xlu0 %1068
    %1070 = vrot.lane.b32.xlu0 %v979, 113
    %v1071 = vpop.permute.xlu0 %1070
    %v1072 = vsel %vm271, %v1069, %v1071
    %v1073 = vsel %vm271, %v1067, %v1069
    %v1074 = vsel %vm271, %v1065, %v1067
    %v1075 = vsel %vm271, %v1071, %v1065
    %v1076 = vmul.f32 %v1074, %v279
    %v1077 = vmul.f32 %v1073, %v283
    %v1078 = vmul.f32 %v1072, %v287
    %v1079 = vmul.f32 %v1075, %v291
    %1080 = vrot.lane.b32.xlu0 %v976, 112
    %v1081 = vpop.permute.xlu0 %1080
    %1082 = vrot.lane.b32.xlu0 %v977, 112
    %v1083 = vpop.permute.xlu0 %1082
    %1084 = vrot.lane.b32.xlu0 %v978, 112
    %v1085 = vpop.permute.xlu0 %1084
    %1086 = vrot.lane.b32.xlu0 %v979, 112
    %v1087 = vpop.permute.xlu0 %1086
    %v1088 = vsel %vm304, %v1085, %v1087
    %v1089 = vsel %vm304, %v1083, %v1085
    %v1090 = vsel %vm304, %v1081, %v1083
    %v1091 = vsel %vm304, %v1087, %v1081
    %v1092 = vmul.f32 %v1090, %v312
    %v1093 = vmul.f32 %v1089, %v316
    %v1094 = vmul.f32 %v1088, %v320
    %v1095 = vmul.f32 %v1091, %v324
    %1096 = vrot.lane.b32.xlu0 %v976, 111
    %v1097 = vpop.permute.xlu0 %1096
    %1098 = vrot.lane.b32.xlu0 %v977, 111
    %v1099 = vpop.permute.xlu0 %1098
    %1100 = vrot.lane.b32.xlu0 %v978, 111
    %v1101 = vpop.permute.xlu0 %1100
    %1102 = vrot.lane.b32.xlu0 %v979, 111
    %v1103 = vpop.permute.xlu0 %1102
    %v1104 = vsel %vm337, %v1101, %v1103
    %v1105 = vsel %vm337, %v1099, %v1101
    %v1106 = vsel %vm337, %v1097, %v1099
    %v1107 = vsel %vm337, %v1103, %v1097
    %v1108 = vmul.f32 %v1106, %v345
    %v1109 = vmul.f32 %v1105, %v349
    %v1110 = vmul.f32 %v1104, %v353
    %v1111 = vmul.f32 %v1107, %v357
    %v1112 = vld [vmem:[%s10] sm:$0xff]
    %v1113 = vld [vmem:[%s11] sm:$0xff]
    %1115 = vset.pattern.permute.xlu0 0
    %1116 = vperm.xlu0 %1115, %v1113
    %v1117 = vpop.permute.xlu0 %1116
    %v1120 = vsel %vm786, %v1112, 0
    %1122 = vmatprep.subr.mxu0 %v993
    %1123 = vmatpush1.msra.mxu0 %v992
    %1124 = vmatprep.subr.mxu0 %v1009
    %1125 = vmatpush1.msra.mxu0 %v1008
    %1126 = vmatprep.subr.mxu0 %v1025
    %1127 = vmatpush1.msra.mxu0 %v1024
    %1128 = vmatprep.subr.mxu0 %v1041
    %1129 = vmatpush1.msra.mxu0 %v1040
    %1130 = vmatprep.subr.mxu0 %v1045
    %1131 = vmatpush1.msra.mxu0 %v1044
    %1132 = vmatprep.subr.mxu0 %v1061
    %1133 = vmatpush1.msra.mxu0 %v1060
    %1134 = vmatprep.subr.mxu0 %v1077
    %1135 = vmatpush1.msra.mxu0 %v1076
    %1136 = vmatprep.subr.mxu0 %v1093
    %1137 = vmatpush1.msra.mxu0 %v1092
    %1138 = vmatprep.subr.mxu0 %v1109
    %1139 = vmatpush1.msra.mxu0 %v1108
    %1140 = vmatprep.subr.mxu0 0.0
    %1141 = vmatpush1.msra.mxu0 0.0
    %1142 = vmatprep.subr.mxu0 0.0
    %1143 = vmatpush1.msra.mxu0 0.0
    %1144 = vmatprep.subr.mxu0 0.0
    %1145 = vmatpush1.msra.mxu0 0.0
    %1146 = vmatprep.subr.mxu0 0.0
    %1147 = vmatpush1.msra.mxu0 0.0
    %1148 = vmatprep.subr.mxu0 0.0
    %1149 = vmatpush1.msra.mxu0 0.0
    %1150 = vmatprep.subr.mxu0 0.0
    %1151 = vmatpush1.msra.mxu0 0.0
    %1152 = vmatprep.subr.mxu0 0.0
    %1153 = vmatpush1.msra.mxu0 0.0
    %1154 = vmatprep.subr.mxu0 0.0
    %1155 = vmatpush1.msra.mxu0 0.0
    %1156 = vmatprep.subr.mxu0 0.0
    %1157 = vmatpush1.msra.mxu0 0.0
    %1158 = vmatprep.subr.mxu0 0.0
    %1159 = vmatpush1.msra.mxu0 0.0
    %1160 = vmatprep.subr.mxu0 0.0
    %1161 = vmatpush1.msra.mxu0 0.0
    %1162 = vmatprep.subr.mxu0 0.0
    %1163 = vmatpush1.msra.mxu0 0.0
    %1164 = vmatprep.subr.mxu0 0.0
    %1165 = vmatpush1.msra.mxu0 0.0
    %1166 = vmatprep.subr.mxu0 0.0
    %1167 = vmatpush1.msra.mxu0 0.0
    %1168 = vmatprep.subr.mxu0 0.0
    %1169 = vmatpush1.msra.mxu0 0.0
    %1170 = vmatprep.subr.mxu0 0.0
    %1171 = vmatpush1.msra.mxu0 0.0
    %1172 = vmatprep.subr.mxu0 0.0
    %1173 = vmatpush1.msra.mxu0 0.0
    %1174 = vmatprep.subr.mxu0 0.0
    %1175 = vmatpush1.msra.mxu0 0.0
    %1176 = vmatprep.subr.mxu0 0.0
    %1177 = vmatpush1.msra.mxu0 0.0
    %1178 = vmatprep.subr.mxu0 0.0
    %1179 = vmatpush1.msra.mxu0 0.0
    %1180 = vmatprep.subr.mxu0 0.0
    %1181 = vmatpush1.msra.mxu0 0.0
    %1182 = vmatprep.subr.mxu0 0.0
    %1183 = vmatpush1.msra.mxu0 0.0
    %1184 = vmatprep.subr.mxu0 0.0
    %1185 = vmatpush1.msra.mxu0 0.0
    %1186 = vmatprep.mubr.f32.mxu0 0.0
    %1187 = vmatmul.mubr.f32.gmra.mrb[0].mxu0 %v1120
    %v1188 = vpop.f32.mrb[0].mxu0
    %v1189 = vadd.f32 %v1117, %v1188
    %v1190 = vpop.f32.mrb[0].mxu0
    %v1191 = vadd.f32 %v1117, %v1190
    %1192 = vdwg.mxu0
    %1193 = vmatprep.subr.mxu0 %v995
    %1194 = vmatpush1.msra.mxu0 %v994
    %1195 = vmatprep.subr.mxu0 %v1011
    %1196 = vmatpush1.msra.mxu0 %v1010
    %1197 = vmatprep.subr.mxu0 %v1027
    %1198 = vmatpush1.msra.mxu0 %v1026
    %1199 = vmatprep.subr.mxu0 %v1043
    %1200 = vmatpush1.msra.mxu0 %v1042
    %1201 = vmatprep.subr.mxu0 %v1047
    %1202 = vmatpush1.msra.mxu0 %v1046
    %1203 = vmatprep.subr.mxu0 %v1063
    %1204 = vmatpush1.msra.mxu0 %v1062
    %1205 = vmatprep.subr.mxu0 %v1079
    %1206 = vmatpush1.msra.mxu0 %v1078
    %1207 = vmatprep.subr.mxu0 %v1095
    %1208 = vmatpush1.msra.mxu0 %v1094
    %1209 = vmatprep.subr.mxu0 %v1111
    %1210 = vmatpush1.msra.mxu0 %v1110
    %1211 = vmatprep.subr.mxu0 0.0
    %1212 = vmatpush1.msra.mxu0 0.0
    %1213 = vmatprep.subr.mxu0 0.0
    %1214 = vmatpush1.msra.mxu0 0.0
    %1215 = vmatprep.subr.mxu0 0.0
    %1216 = vmatpush1.msra.mxu0 0.0
    %1217 = vmatprep.subr.mxu0 0.0
    %1218 = vmatpush1.msra.mxu0 0.0
    %1219 = vmatprep.subr.mxu0 0.0
    %1220 = vmatpush1.msra.mxu0 0.0
    %1221 = vmatprep.subr.mxu0 0.0
    %1222 = vmatpush1.msra.mxu0 0.0
    %1223 = vmatprep.subr.mxu0 0.0
    %1224 = vmatpush1.msra.mxu0 0.0
    %1225 = vmatprep.subr.mxu0 0.0
    %1226 = vmatpush1.msra.mxu0 0.0
    %1227 = vmatprep.subr.mxu0 0.0
    %1228 = vmatpush1.msra.mxu0 0.0
    %1229 = vmatprep.subr.mxu0 0.0
    %1230 = vmatpush1.msra.mxu0 0.0
    %1231 = vmatprep.subr.mxu0 0.0
    %1232 = vmatpush1.msra.mxu0 0.0
    %1233 = vmatprep.subr.mxu0 0.0
    %1234 = vmatpush1.msra.mxu0 0.0
    %1235 = vmatprep.subr.mxu0 0.0
    %1236 = vmatpush1.msra.mxu0 0.0
    %1237 = vmatprep.subr.mxu0 0.0
    %1238 = vmatpush1.msra.mxu0 0.0
    %1239 = vmatprep.subr.mxu0 0.0
    %1240 = vmatpush1.msra.mxu0 0.0
    %1241 = vmatprep.subr.mxu0 0.0
    %1242 = vmatpush1.msra.mxu0 0.0
    %1243 = vmatprep.subr.mxu0 0.0
    %1244 = vmatpush1.msra.mxu0 0.0
    %1245 = vmatprep.subr.mxu0 0.0
    %1246 = vmatpush1.msra.mxu0 0.0
    %1247 = vmatprep.subr.mxu0 0.0
    %1248 = vmatpush1.msra.mxu0 0.0
    %1249 = vmatprep.subr.mxu0 0.0
    %1250 = vmatpush1.msra.mxu0 0.0
    %1251 = vmatprep.subr.mxu0 0.0
    %1252 = vmatpush1.msra.mxu0 0.0
    %1253 = vmatprep.subr.mxu0 0.0
    %1254 = vmatpush1.msra.mxu0 0.0
    %1255 = vmatprep.subr.mxu0 0.0
    %1256 = vmatpush1.msra.mxu0 0.0
    %1257 = vmatprep.mubr.f32.mxu0 0.0
    %1258 = vmatmul.mubr.f32.gmra.mrb[0].mxu0 %v1120
    %v1259 = vpop.f32.mrb[0].mxu0
    %v1260 = vadd.f32 %v1117, %v1259
    %v1261 = vpop.f32.mrb[0].mxu0
    %v1262 = vadd.f32 %v1117, %v1261
    %1263 = vdwg.mxu0
    %v1264 = vadd.f32 %v1189, %v1191
    %v1265 = vadd.f32 %v1264, %v1260
    %v1266 = vadd.f32 %v1265, %v1262
    %1267 = vadd.xlane.f32.xlu0 %v1266
    %v1268 = vpop.xlane.xlu0 %1267
    %v1269 = vmul.f32 %v1268, %v603
    %v1270 = vmul.f32 %v1189, %v1189
    %v1271 = vmul.f32 %v1191, %v1191
    %v1272 = vmul.f32 %v1260, %v1260
    %v1273 = vmul.f32 %v1262, %v1262
    %v1274 = vadd.f32 %v1270, %v1271
    %v1275 = vadd.f32 %v1274, %v1272
    %v1276 = vadd.f32 %v1275, %v1273
    %1277 = vadd.xlane.f32.xlu0 %v1276
    %v1278 = vpop.xlane.xlu0 %1277
    %v1279 = vmul.f32 %v1278, %v603
    %v1280 = vmul.f32 %v1269, %v1269
    %v1281 = vsub.f32 %v1279, %v1280
    %v1282 = vmax.f32 %v1281, 0.0
    %v1283 = vld [vmem:[%s12] sm:$0xff]
    %v1284 = vadd.f32 %v1282, 1e-05
    %v1285 = vrsqrt.pop %v1284
    %v1286 = vmul.f32 %v1283, %v1285
    %1288 = vset.pattern.permute.xlu0 0
    %1289 = vperm.xlu0 %1288, %v1286
    %v1290 = vpop.permute.xlu0 %1289
    %v1292 = vmul.f32 %v1189, %v1290
    %v1293 = vmul.f32 %v1191, %v1290
    %v1294 = vmul.f32 %v1260, %v1290
    %v1295 = vmul.f32 %v1262, %v1290
    %v1296 = vld [vmem:[%s13] sm:$0xff]
    %v1297 = vmul.f32 %v1269, %v1286
    %v1298 = vsub.f32 %v1296, %v1297
    %1300 = vset.pattern.permute.xlu0 0
    %1301 = vperm.xlu0 %1300, %v1298
    %v1302 = vpop.permute.xlu0 %1301
    %v1304 = vadd.f32 %v1292, %v1302
    %v1305 = vadd.f32 %v1293, %v1302
    %v1306 = vadd.f32 %v1294, %v1302
    %v1307 = vadd.f32 %v1295, %v1302
    %v1308 = vld [vmem:[%s14] sm:$0xff]
    %v1309 = vld [vmem:[%s15] sm:$0xff]
    %1311 = vset.pattern.permute.xlu0 0
    %1312 = vperm.xlu0 %1311, %v1309
    %v1313 = vpop.permute.xlu0 %1312
    %vm1315 = vcmask 31744
    %v1317 = vsel %vm1315, %v1308, 0
    %v1319 = vsel %vm416, %v62, 0
    %v1321 = vsel %vm416, %v66, 0
    %v1323 = vsel %vm416, %v63, 0
    %v1325 = vsel %vm416, %v67, 0
    %1327 = vmatprep.subr.mxu0 %v1321
    %1328 = vmatpush1.msra.mxu0 %v1319
    %1329 = vmatprep.subr.mxu0 0.0
    %1330 = vmatpush1.msra.mxu0 0.0
    %1331 = vmatprep.subr.mxu0 0.0
    %1332 = vmatpush1.msra.mxu0 0.0
    %1333 = vmatprep.subr.mxu0 0.0
    %1334 = vmatpush1.msra.mxu0 0.0
    %1335 = vmatprep.subr.mxu0 0.0
    %1336 = vmatpush1.msra.mxu0 0.0
    %1337 = vmatprep.subr.mxu0 0.0
    %1338 = vmatpush1.msra.mxu0 0.0
    %1339 = vmatprep.subr.mxu0 0.0
    %1340 = vmatpush1.msra.mxu0 0.0
    %1341 = vmatprep.subr.mxu0 0.0
    %1342 = vmatpush1.msra.mxu0 0.0
    %1343 = vmatprep.subr.mxu0 0.0
    %1344 = vmatpush1.msra.mxu0 0.0
    %1345 = vmatprep.subr.mxu0 0.0
    %1346 = vmatpush1.msra.mxu0 0.0
    %1347 = vmatprep.subr.mxu0 0.0
    %1348 = vmatpush1.msra.mxu0 0.0
    %1349 = vmatprep.subr.mxu0 0.0
    %1350 = vmatpush1.msra.mxu0 0.0
    %1351 = vmatprep.subr.mxu0 0.0
    %1352 = vmatpush1.msra.mxu0 0.0
    %1353 = vmatprep.subr.mxu0 0.0
    %1354 = vmatpush1.msra.mxu0 0.0
    %1355 = vmatprep.subr.mxu0 0.0
    %1356 = vmatpush1.msra.mxu0 0.0
    %1357 = vmatprep.subr.mxu0 0.0
    %1358 = vmatpush1.msra.mxu0 0.0
    %1359 = vmatprep.subr.mxu0 0.0
    %1360 = vmatpush1.msra.mxu0 0.0
    %1361 = vmatprep.subr.mxu0 0.0
    %1362 = vmatpush1.msra.mxu0 0.0
    %1363 = vmatprep.subr.mxu0 0.0
    %1364 = vmatpush1.msra.mxu0 0.0
    %1365 = vmatprep.subr.mxu0 0.0
    %1366 = vmatpush1.msra.mxu0 0.0
    %1367 = vmatprep.subr.mxu0 0.0
    %1368 = vmatpush1.msra.mxu0 0.0
    %1369 = vmatprep.subr.mxu0 0.0
    %1370 = vmatpush1.msra.mxu0 0.0
    %1371 = vmatprep.subr.mxu0 0.0
    %1372 = vmatpush1.msra.mxu0 0.0
    %1373 = vmatprep.subr.mxu0 0.0
    %1374 = vmatpush1.msra.mxu0 0.0
    %1375 = vmatprep.subr.mxu0 0.0
    %1376 = vmatpush1.msra.mxu0 0.0
    %1377 = vmatprep.subr.mxu0 0.0
    %1378 = vmatpush1.msra.mxu0 0.0
    %1379 = vmatprep.subr.mxu0 0.0
    %1380 = vmatpush1.msra.mxu0 0.0
    %1381 = vmatprep.subr.mxu0 0.0
    %1382 = vmatpush1.msra.mxu0 0.0
    %1383 = vmatprep.subr.mxu0 0.0
    %1384 = vmatpush1.msra.mxu0 0.0
    %1385 = vmatprep.subr.mxu0 0.0
    %1386 = vmatpush1.msra.mxu0 0.0
    %1387 = vmatprep.subr.mxu0 0.0
    %1388 = vmatpush1.msra.mxu0 0.0
    %1389 = vmatprep.subr.mxu0 0.0
    %1390 = vmatpush1.msra.mxu0 0.0
    %1391 = vmatprep.mubr.f32.mxu0 0.0
    %1392 = vmatmul.mubr.f32.gmra.mrb[0].mxu0 %v1317
    %v1393 = vpop.f32.mrb[0].mxu0
    %v1394 = vadd.f32 %v1313, %v1393
    %v1395 = vpop.f32.mrb[0].mxu0
    %v1396 = vadd.f32 %v1313, %v1395
    %1397 = vdwg.mxu0
    %1398 = vmatprep.subr.mxu0 %v1325
    %1399 = vmatpush1.msra.mxu0 %v1323
    %1400 = vmatprep.subr.mxu0 0.0
    %1401 = vmatpush1.msra.mxu0 0.0
    %1402 = vmatprep.subr.mxu0 0.0
    %1403 = vmatpush1.msra.mxu0 0.0
    %1404 = vmatprep.subr.mxu0 0.0
    %1405 = vmatpush1.msra.mxu0 0.0
    %1406 = vmatprep.subr.mxu0 0.0
    %1407 = vmatpush1.msra.mxu0 0.0
    %1408 = vmatprep.subr.mxu0 0.0
    %1409 = vmatpush1.msra.mxu0 0.0
    %1410 = vmatprep.subr.mxu0 0.0
    %1411 = vmatpush1.msra.mxu0 0.0
    %1412 = vmatprep.subr.mxu0 0.0
    %1413 = vmatpush1.msra.mxu0 0.0
    %1414 = vmatprep.subr.mxu0 0.0
    %1415 = vmatpush1.msra.mxu0 0.0
    %1416 = vmatprep.subr.mxu0 0.0
    %1417 = vmatpush1.msra.mxu0 0.0
    %1418 = vmatprep.subr.mxu0 0.0
    %1419 = vmatpush1.msra.mxu0 0.0
    %1420 = vmatprep.subr.mxu0 0.0
    %1421 = vmatpush1.msra.mxu0 0.0
    %1422 = vmatprep.subr.mxu0 0.0
    %1423 = vmatpush1.msra.mxu0 0.0
    %1424 = vmatprep.subr.mxu0 0.0
    %1425 = vmatpush1.msra.mxu0 0.0
    %1426 = vmatprep.subr.mxu0 0.0
    %1427 = vmatpush1.msra.mxu0 0.0
    %1428 = vmatprep.subr.mxu0 0.0
    %1429 = vmatpush1.msra.mxu0 0.0
    %1430 = vmatprep.subr.mxu0 0.0
    %1431 = vmatpush1.msra.mxu0 0.0
    %1432 = vmatprep.subr.mxu0 0.0
    %1433 = vmatpush1.msra.mxu0 0.0
    %1434 = vmatprep.subr.mxu0 0.0
    %1435 = vmatpush1.msra.mxu0 0.0
    %1436 = vmatprep.subr.mxu0 0.0
    %1437 = vmatpush1.msra.mxu0 0.0
    %1438 = vmatprep.subr.mxu0 0.0
    %1439 = vmatpush1.msra.mxu0 0.0
    %1440 = vmatprep.subr.mxu0 0.0
    %1441 = vmatpush1.msra.mxu0 0.0
    %1442 = vmatprep.subr.mxu0 0.0
    %1443 = vmatpush1.msra.mxu0 0.0
    %1444 = vmatprep.subr.mxu0 0.0
    %1445 = vmatpush1.msra.mxu0 0.0
    %1446 = vmatprep.subr.mxu0 0.0
    %1447 = vmatpush1.msra.mxu0 0.0
    %1448 = vmatprep.subr.mxu0 0.0
    %1449 = vmatpush1.msra.mxu0 0.0
    %1450 = vmatprep.subr.mxu0 0.0
    %1451 = vmatpush1.msra.mxu0 0.0
    %1452 = vmatprep.subr.mxu0 0.0
    %1453 = vmatpush1.msra.mxu0 0.0
    %1454 = vmatprep.subr.mxu0 0.0
    %1455 = vmatpush1.msra.mxu0 0.0
    %1456 = vmatprep.subr.mxu0 0.0
    %1457 = vmatpush1.msra.mxu0 0.0
    %1458 = vmatprep.subr.mxu0 0.0
    %1459 = vmatpush1.msra.mxu0 0.0
    %1460 = vmatprep.subr.mxu0 0.0
    %1461 = vmatpush1.msra.mxu0 0.0
    %1462 = vmatprep.mubr.f32.mxu0 0.0
    %1463 = vmatmul.mubr.f32.gmra.mrb[0].mxu0 %v1317
    %v1464 = vpop.f32.mrb[0].mxu0
    %v1465 = vadd.f32 %v1313, %v1464
    %v1466 = vpop.f32.mrb[0].mxu0
    %v1467 = vadd.f32 %v1313, %v1466
    %1468 = vdwg.mxu0
    %v1469 = vadd.f32 %v1304, %v1394
    %v1470 = vadd.f32 %v1305, %v1396
    %v1471 = vadd.f32 %v1306, %v1465
    %v1472 = vadd.f32 %v1307, %v1467
    %v1473 = vmax.f32 %v1469, 0.0
    %v1474 = vmax.f32 %v1470, 0.0
    %v1475 = vmax.f32 %v1471, 0.0
    %v1476 = vmax.f32 %v1472, 0.0
    %1477 = vst [vmem:[#allocation2] sm:$0xff] %v1473
    %1478 = vst [vmem:[#allocation2 + $0x8] sm:$0xff] %v1474
    %1479 = vst [vmem:[#allocation2 + $0x10] sm:$0xff] %v1475
    %1480 = vst [vmem:[#allocation2 + $0x18] sm:$0xff] %v1476
    // Predicated region
    $region66: #{tpu_custom_call.1} parent=1 // pred_check
      _
    $region67: #{tpu_custom_call.1} parent=1 // pred_check_branch
      %1482 = sbr.rel (0) target = $region69
    $region68: #{tpu_custom_call.1} parent=1 // pred_region
      %s1484 = ssub.s32 512, 512
      %1485 = vsyncadd [#allocation3], %s1484
      %s1487 = sshll.u32 [#allocation2], 4
      %s1488 = int_to_ptr.vmem [resolvable:$true] %s1487
      %1490 = dma.vmem_to_hbm [thread:$0]  %s1488, 512, %s16, [#allocation3]
    $region69: #{tpu_custom_call.1} parent=1 // pred_fallthru
      _
    // Predicated region
    $region70: #{tpu_custom_call.1} parent=1 // pred_check
      _
    $region71: #{tpu_custom_call.1} parent=1 // pred_check_branch
      %1492 = sbr.rel (0) target = $region73
    $region72: #{tpu_custom_call.1} parent=1 // pred_region
      %1493 = dma.done [#allocation3], 512
    $region73: #{tpu_custom_call.1} parent=1 // pred_fallthru
      _
    %1494 = vsyncpa [#allocation3], 1

</llo_original>
